<compile_context>
chip_gen: v7x
topology: tpu7x:2x2x1
jax: 0.10.0
libtpu: 0.0.40
codegen_flags: <defaults>
</compile_context>

<pallas_src>
import functools

import jax
import jax.numpy as jnp
from jax import lax
from jax.experimental import pallas as pl
from jax.experimental.pallas import tpu as pltpu


def _round_up(a, m):
    return ((a + m - 1) // m) * m


# ----------------------------------------------------------------------------
# d == 1 branch: dense kSize x kSize conv, stride 1, same padding, no bias.
# Flattened-padded-row layout: output flat index q = h*Wp + w; tap (kh, kw)
# reads input flat index q + kh*Wp + kw (a contiguous lane slice).  Columns
# w >= W of each output row are junk and are stripped in the wrapper.
# ----------------------------------------------------------------------------
def _dense_conv_acc_kernel(x_ref, w_ref, o_ref, *, K, Wp, Lo_pad):
    """Accumulate variant (no im2col): K*K small MXU matmuls.
    x_ref: (1, Cin, Lp); w_ref: (K*K, Cout, Cin); o_ref: (1, Cout, Lo_pad)."""
    acc = jnp.zeros(o_ref.shape[1:], jnp.float32)
    for kh in range(K):
        for kw in range(K):
            off = kh * Wp + kw
            acc = acc + jnp.dot(w_ref[kh * K + kw],
                                x_ref[0, :, off:off + Lo_pad],
                                preferred_element_type=jnp.float32)
    o_ref[0] = acc


def _dense_conv_im2col_kernel(x_ref, w_ref, o_ref, patch_ref, *, K, Wp, Lo_pad):
    """im2col variant for large K*K*Cin.  Channel block per tap is padded to a
    multiple of 8 in the wrapper, so every patch store is sublane-aligned.
    x_ref: (1, Cin8, Lp); w_ref: (Cout, K*K*Cin8); o_ref: (1, Cout, Lo_pad);
    patch_ref: (K*K*Cin8, Lo_pad) scratch (fully rewritten every step)."""
    Cin8 = x_ref.shape[1]
    for kh in range(K):
        for kw in range(K):
            tap = kh * K + kw
            off = kh * Wp + kw
            patch_ref[tap * Cin8:(tap + 1) * Cin8, :] = \
                x_ref[0, :, off:off + Lo_pad]
    o_ref[0] = jnp.dot(w_ref[...], patch_ref[...],
                       preferred_element_type=jnp.float32)


def c3block_d1(x, w, *, im2col=None):
    """C3block(nIn, nOut, kSize, stride=1, d=1) forward."""
    N, Cin, H, W = x.shape
    Cout, _, K, _ = w.shape
    p = (K - 1) // 2
    Wp = W + 2 * p
    Lo = H * Wp
    Lo_pad = _round_up(Lo, 128)
    if im2col is None:
        im2col = (K * K * Cin >= 128)
    Cin_k = _round_up(Cin, 8) if im2col else Cin

    # Flat padded input must cover every tap slice of the (junk-padded) output.
    Lp = _round_up(max((H + 2 * p) * Wp, Lo_pad + (K - 1) * (Wp + 1)), 128)

    xk = x.astype(jnp.float32)
    if Cin_k != Cin:
        xk = jnp.pad(xk, ((0, 0), (0, Cin_k - Cin), (0, 0), (0, 0)))
    xp = jnp.pad(xk, ((0, 0), (0, 0), (p, p), (p, p)))
    x_flat = xp.reshape(N, Cin_k, (H + 2 * p) * Wp)
    x_flat = jnp.pad(x_flat, ((0, 0), (0, 0), (0, Lp - (H + 2 * p) * Wp)))

    if im2col:
        # (Cout, K*K*Cin8), tap-major, with zero columns for padded channels.
        w_t = jnp.transpose(w, (2, 3, 1, 0))                      # (K,K,Cin,Cout)
        w_t = jnp.pad(w_t, ((0, 0), (0, 0), (0, Cin_k - Cin), (0, 0)))
        w_arg = w_t.reshape(K * K * Cin_k, Cout).T.astype(jnp.float32)
        kernel = functools.partial(_dense_conv_im2col_kernel,
                                   K=K, Wp=Wp, Lo_pad=Lo_pad)
        w_spec = pl.BlockSpec(w_arg.shape, lambda n: (0, 0))
        scratch = [pltpu.VMEM((K * K * Cin_k, Lo_pad), jnp.float32)]
    else:
        # (K*K, Cout, Cin) per-tap weight matrices.
        w_arg = jnp.transpose(w, (2, 3, 0, 1)).reshape(
            K * K, Cout, Cin).astype(jnp.float32)
        kernel = functools.partial(_dense_conv_acc_kernel,
                                   K=K, Wp=Wp, Lo_pad=Lo_pad)
        w_spec = pl.BlockSpec(w_arg.shape, lambda n: (0, 0, 0))
        scratch = []

    out = pl.pallas_call(
        kernel,
        out_shape=jax.ShapeDtypeStruct((N, Cout, Lo_pad), jnp.float32),
        grid=(N,),
        in_specs=[pl.BlockSpec((1, Cin_k, Lp), lambda n: (n, 0, 0)), w_spec],
        out_specs=pl.BlockSpec((1, Cout, Lo_pad), lambda n: (n, 0, 0)),
        scratch_shapes=scratch,
        compiler_params=pltpu.CompilerParams(
            dimension_semantics=("parallel",)),
    )(x_flat, w_arg)
    return out[:, :, :Lo].reshape(N, Cout, H, Wp)[:, :, :, :W]


# ----------------------------------------------------------------------------
# d > 1 branch (kSize == 3, stride == 1):
#   depthwise (2d-1,1) conv -> BN -> PReLU -> depthwise (1,2d-1) conv -> BN
#   -> depthwise 3x3 dilated conv -> 1x1 pointwise conv.
# B images are stacked per grid step as a (B*Cin, L_pad) slab; shifted taps
# are static lane slices of a zero-margined VMEM working buffer; an interior
# mask re-establishes exact zero padding after each per-point stage; the
# pointwise conv is one block-diagonal MXU matmul over the stacked images.
# ----------------------------------------------------------------------------
def _c3_dilated_kernel(x_ref, pp_ref, w4_ref, mask_ref, o_ref, buf_ref,
                       *, d, ck, Wp, L_pad, Mg):
    """x_ref: (1, R, L_pad) with R = B*Cin; pp_ref: (R, 2ck+9+5) packed params;
    w4_ref: (B*Cout, R) block-diagonal pointwise weight; mask_ref: (1, L_pad);
    o_ref: (1, B*Cout, L_pad); buf_ref: (R, 2*Mg + L_pad) working buffer."""
    R = x_ref.shape[1]
    cp = d - 1
    base = 2 * ck + 9                     # start of [s1, b1, alpha1, s2, b2]
    f32 = jnp.float32
    mask = mask_ref[...]                  # (1, L_pad) interior indicator

    def par(j):                           # (R, 1) per-row parameter column
        return pp_ref[:, j:j + 1]

    def shifted(off):                     # (R, L_pad) slab read at flat offset
        return buf_ref[:, Mg + off:Mg + off + L_pad]

    # Zero the halo margins every step (scratch is not zero-initialized and
    # persists; re-zeroing is a few KB of stores and stays correct even if a
    # "parallel" grid axis is sharded across TensorCores).
    buf_ref[:, :Mg] = jnp.zeros((R, Mg), f32)
    buf_ref[:, Mg + L_pad:] = jnp.zeros((R, Mg), f32)
    buf_ref[:, Mg:Mg + L_pad] = x_ref[0]

    # -- depthwise (ck, 1) conv along H -> BN1 -> PReLU --
    y = jnp.zeros((R, L_pad), f32)
    for t in range(ck):
        y = y + par(t) * shifted((t - cp) * Wp)
    y = y * par(base + 0) + par(base + 1)                  # BN1 (folded)
    y = jnp.where(y > 0.0, y, par(base + 2) * y)           # PReLU
    buf_ref[:, Mg:Mg + L_pad] = y * mask                   # re-zero halo

    # -- depthwise (1, ck) conv along W -> BN2 --
    y = jnp.zeros((R, L_pad), f32)
    for t in range(ck):
        y = y + par(ck + t) * shifted(t - cp)
    y = y * par(base + 3) + par(base + 4)                  # BN2 (folded)
    buf_ref[:, Mg:Mg + L_pad] = y * mask

    # -- depthwise 3x3 dilated conv --
    y = jnp.zeros((R, L_pad), f32)
    for ki in range(3):
        for kj in range(3):
            off = (ki - 1) * d * Wp + (kj - 1) * d
            y = y + par(2 * ck + ki * 3 + kj) * shifted(off)

    # -- 1x1 pointwise channel mix on the MXU (block-diag over stacked imgs) --
    o_ref[0] = jnp.dot(w4_ref[...], y, preferred_element_type=jnp.float32)


def c3block_d2(x, W1, W2, W3, W4, alpha1, s1, b1, s2, b2, d, ksize=3):
    """C3block(nIn, nOut, kSize=3, stride=1, d>1) forward (BN in eval mode)."""
    assert ksize == 3 and d > 1, "kernel written for kSize == 3, stride == 1"
    N, Cin, H, W = x.shape
    Cout = W4.shape[0]
    ck = 2 * d - 1
    Hp, Wp = H + 2 * d, W + 2 * d
    L = Hp * Wp
    L_pad = _round_up(L, 128)
    max_off = d * Wp + d
    Mg = _round_up(max_off, 128)

    # Images per grid step: fill the 8 f32 sublanes at small channel counts.
    B = max(1, 8 // Cin) if Cin < 8 else 1
    B = max(1, min(B, N))
    Np = _round_up(N, B)

    xk = x.astype(jnp.float32)
    if Np != N:
        xk = jnp.pad(xk, ((0, Np - N), (0, 0), (0, 0), (0, 0)))
    xp = jnp.pad(xk, ((0, 0), (0, 0), (d, d), (d, d))).reshape(Np, Cin, L)
    xp = jnp.pad(xp, ((0, 0), (0, 0), (0, L_pad - L)))
    xg = xp.reshape(Np // B, B * Cin, L_pad)

    # Packed per-channel parameter table:
    # [w1(ck) | w2(ck) | w3(9) | s1 b1 alpha1 s2 b2], tiled to B*Cin rows.
    pp = jnp.concatenate(
        [W1.reshape(Cin, ck), W2.reshape(Cin, ck),
         W3.reshape(Cin, ksize * ksize),
         s1[:, None], b1[:, None], alpha1[:, None], s2[:, None], b2[:, None]],
        axis=1).astype(jnp.float32)
    pp = jnp.tile(pp, (B, 1))

    w4 = W4.reshape(Cout, Cin).astype(jnp.float32)
    w4bd = jnp.kron(jnp.eye(B, dtype=jnp.float32), w4)      # (B*Cout, B*Cin)

    rm = ((jnp.arange(Hp) >= d) & (jnp.arange(Hp) < d + H)).astype(jnp.float32)
    cm = ((jnp.arange(Wp) >= d) & (jnp.arange(Wp) < d + W)).astype(jnp.float32)
    mask = jnp.pad((rm[:, None] * cm[None, :]).reshape(L),
                   (0, L_pad - L)).reshape(1, L_pad)

    out = pl.pallas_call(
        functools.partial(_c3_dilated_kernel, d=d, ck=ck, Wp=Wp,
                          L_pad=L_pad, Mg=Mg),
        out_shape=jax.ShapeDtypeStruct((Np // B, B * Cout, L_pad), jnp.float32),
        grid=(Np // B,),
        in_specs=[
            pl.BlockSpec((1, B * Cin, L_pad), lambda g: (g, 0, 0)),
            pl.BlockSpec(pp.shape, lambda g: (0, 0)),
            pl.BlockSpec(w4bd.shape, lambda g: (0, 0)),
            pl.BlockSpec(mask.shape, lambda g: (0, 0)),
        ],
        out_specs=pl.BlockSpec((1, B * Cout, L_pad), lambda g: (g, 0, 0)),
        scratch_shapes=[pltpu.VMEM((B * Cin, 2 * Mg + L_pad), jnp.float32)],
        compiler_params=pltpu.CompilerParams(
            dimension_semantics=("parallel",)),
    )(xg, pp, w4bd, mask)

    out = out.reshape(Np, Cout, L_pad)[:N, :, :L]
    return out.reshape(N, Cout, Hp, Wp)[:, :, d:d + H, d:d + W]


# ----------------------------------------------------------------------------
# Helpers / pure-JAX references
# ----------------------------------------------------------------------------
def fold_bn(gamma, beta, mean, var, eps=1e-5):
    scale = gamma / jnp.sqrt(var + eps)
    return scale, beta - mean * scale


_DN = ("NCHW", "OIHW", "NCHW")
_HI = lax.Precision.HIGHEST


def ref_d1(x, w):
    pad = (w.shape[2] - 1) // 2
    return lax.conv_general_dilated(x, w, (1, 1), ((pad, pad), (pad, pad)),
                                    dimension_numbers=_DN, precision=_HI)


def ref_d2(x, W1, W2, W3, W4, alpha1, s1, b1, s2, b2, d):
    Cin = x.shape[1]
    cp = d - 1
    y = lax.conv_general_dilated(x, W1, (1, 1), ((cp, cp), (0, 0)),
                                 dimension_numbers=_DN,
                                 feature_group_count=Cin, precision=_HI)
    y = y * s1[None, :, None, None] + b1[None, :, None, None]
    y = jnp.where(y > 0, y, alpha1[None, :, None, None] * y)
    y = lax.conv_general_dilated(y, W2, (1, 1), ((0, 0), (cp, cp)),
                                 dimension_numbers=_DN,
                                 feature_group_count=Cin, precision=_HI)
    y = y * s2[None, :, None, None] + b2[None, :, None, None]
    y = lax.conv_general_dilated(y, W3, (1, 1), ((d, d), (d, d)),
                                 rhs_dilation=(d, d), dimension_numbers=_DN,
                                 feature_group_count=Cin, precision=_HI)
    y = lax.conv_general_dilated(y, W4, (1, 1), ((0, 0), (0, 0)),
                                 dimension_numbers=_DN, precision=_HI)
    return y


if __name__ == "__main__":
    N, nIn, nOut, H, W, k = 2, 4, 8, 16, 16, 3
    key = jax.random.PRNGKey(0)
    ks = jax.random.split(key, 16)
    x = jax.random.normal(ks[0], (N, nIn, H, W), jnp.float32)

    # ---- d = 1 branch (both schedules) ----
    Wd1 = 0.2 * jax.random.normal(ks[1], (nOut, nIn, k, k), jnp.float32)
    r1 = ref_d1(x, Wd1)
    out1 = jax.block_until_ready(c3block_d1(x, Wd1))            # accumulate
    out1b = jax.block_until_ready(c3block_d1(x, Wd1, im2col=True))
    assert out1.shape == (N, nOut, H, W)
    err1 = jnp.max(jnp.abs(out1 - r1)) / (jnp.max(jnp.abs(r1)) + 1e-6)
    err1b = jnp.max(jnp.abs(out1b - r1)) / (jnp.max(jnp.abs(r1)) + 1e-6)
    assert float(err1) < 2e-2, f"d=1 (acc) mismatch, rel err {float(err1)}"
    assert float(err1b) < 2e-2, f"d=1 (im2col) mismatch, rel err {float(err1b)}"

    # ---- d = 2 branch ----
    d = 2
    ck = 2 * d - 1
    W1 = 0.3 * jax.random.normal(ks[2], (nIn, 1, ck, 1), jnp.float32)
    W2 = 0.3 * jax.random.normal(ks[3], (nIn, 1, 1, ck), jnp.float32)
    W3 = 0.3 * jax.random.normal(ks[4], (nIn, 1, k, k), jnp.float32)
    W4 = 0.3 * jax.random.normal(ks[5], (nOut, nIn, 1, 1), jnp.float32)
    alpha1 = 0.25 * jnp.ones((nIn,), jnp.float32)        # PyTorch PReLU init
    g1 = 1.0 + 0.1 * jax.random.normal(ks[6], (nIn,), jnp.float32)
    be1 = 0.1 * jax.random.normal(ks[7], (nIn,), jnp.float32)
    m1 = 0.1 * jax.random.normal(ks[8], (nIn,), jnp.float32)
    v1 = jax.random.uniform(ks[9], (nIn,), jnp.float32, 0.5, 1.5)
    g2 = 1.0 + 0.1 * jax.random.normal(ks[10], (nIn,), jnp.float32)
    be2 = 0.1 * jax.random.normal(ks[11], (nIn,), jnp.float32)
    m2 = 0.1 * jax.random.normal(ks[12], (nIn,), jnp.float32)
    v2 = jax.random.uniform(ks[13], (nIn,), jnp.float32, 0.5, 1.5)
    s1, b1 = fold_bn(g1, be1, m1, v1)
    s2, b2 = fold_bn(g2, be2, m2, v2)

    out2 = jax.block_until_ready(
        c3block_d2(x, W1, W2, W3, W4, alpha1, s1, b1, s2, b2, d))
    r2 = ref_d2(x, W1, W2, W3, W4, alpha1, s1, b1, s2, b2, d)
    assert out2.shape == (N, nOut, H, W)
    err2 = jnp.max(jnp.abs(out2 - r2)) / (jnp.max(jnp.abs(r2)) + 1e-6)
    assert float(err2) < 2e-2, f"d=2 mismatch, rel err {float(err2)}"

    print("KERNEL_OK")
</pallas_src>

<mosaic_0001>
module attributes {stable_mosaic.version = 11 : i64} {
  func.func @_dense_conv_acc_kernel(%arg0: i32, %arg1: memref<1x4x512xf32, #tpu.memory_space<vmem>>, %arg2: memref<9x8x4xf32, #tpu.memory_space<vmem>>, %arg3: memref<1x8x384xf32, #tpu.memory_space<vmem>>) attributes {dimension_semantics = [#tpu.dimension_semantics<parallel>], iteration_bounds = array<i64: 2>, scalar_prefetch = 0 : i64, scratch_operands = 0 : i64, tpu.core_type = #tpu.core_type<tc>, window_params = [{transform_indices = @transform_0, window_bounds = array<i64: 1, 4, 512>}, {pipeline_mode = #tpu.pipeline_mode<synchronous>, transform_indices = @transform_1, window_bounds = array<i64: 9, 8, 4>}, {transform_indices = @transform_2, window_bounds = array<i64: 1, 8, 384>}]} {
    %cst = arith.constant 0.000000e+00 : f32
    %0 = vector.broadcast %cst : f32 to vector<8x384xf32>
    %c0 = arith.constant 0 : index
    %c0_0 = arith.constant 0 : index
    %c0_1 = arith.constant 0 : index
    %1 = vector.load %arg2[%c0, %c0_0, %c0_1] : memref<9x8x4xf32, #tpu.memory_space<vmem>>, vector<1x8x4xf32>
    %2 = vector.shape_cast %1 : vector<1x8x4xf32> to vector<8x4xf32>
    %c0_2 = arith.constant 0 : index
    %c0_3 = arith.constant 0 : index
    %c0_4 = arith.constant 0 : index
    %3 = vector.load %arg1[%c0_2, %c0_3, %c0_4] : memref<1x4x512xf32, #tpu.memory_space<vmem>>, vector<1x4x384xf32>
    %4 = vector.shape_cast %3 : vector<1x4x384xf32> to vector<4x384xf32>
    %cst_5 = arith.constant dense<0.000000e+00> : vector<8x384xf32>
    %5 = tpu.matmul %2, %4, %cst_5 {dimension_numbers = #tpu.dot_dimension_numbers<[1], [0], [0], [1], [0, 0, 1, 1], [], []>} : vector<8x4xf32>, vector<4x384xf32>, vector<8x384xf32> -> vector<8x384xf32>
    %6 = arith.addf %0, %5 : vector<8x384xf32>
    %c1 = arith.constant 1 : index
    %c0_6 = arith.constant 0 : index
    %c0_7 = arith.constant 0 : index
    %7 = vector.load %arg2[%c1, %c0_6, %c0_7] : memref<9x8x4xf32, #tpu.memory_space<vmem>>, vector<1x8x4xf32>
    %8 = vector.shape_cast %7 : vector<1x8x4xf32> to vector<8x4xf32>
    %c0_8 = arith.constant 0 : index
    %c0_9 = arith.constant 0 : index
    %c1_10 = arith.constant 1 : index
    %9 = vector.load %arg1[%c0_8, %c0_9, %c1_10] : memref<1x4x512xf32, #tpu.memory_space<vmem>>, vector<1x4x384xf32>
    %10 = vector.shape_cast %9 : vector<1x4x384xf32> to vector<4x384xf32>
    %cst_11 = arith.constant dense<0.000000e+00> : vector<8x384xf32>
    %11 = tpu.matmul %8, %10, %cst_11 {dimension_numbers = #tpu.dot_dimension_numbers<[1], [0], [0], [1], [0, 0, 1, 1], [], []>} : vector<8x4xf32>, vector<4x384xf32>, vector<8x384xf32> -> vector<8x384xf32>
    %12 = arith.addf %6, %11 : vector<8x384xf32>
    %c2 = arith.constant 2 : index
    %c0_12 = arith.constant 0 : index
    %c0_13 = arith.constant 0 : index
    %13 = vector.load %arg2[%c2, %c0_12, %c0_13] : memref<9x8x4xf32, #tpu.memory_space<vmem>>, vector<1x8x4xf32>
    %14 = vector.shape_cast %13 : vector<1x8x4xf32> to vector<8x4xf32>
    %c0_14 = arith.constant 0 : index
    %c0_15 = arith.constant 0 : index
    %c2_16 = arith.constant 2 : index
    %15 = vector.load %arg1[%c0_14, %c0_15, %c2_16] : memref<1x4x512xf32, #tpu.memory_space<vmem>>, vector<1x4x384xf32>
    %16 = vector.shape_cast %15 : vector<1x4x384xf32> to vector<4x384xf32>
    %cst_17 = arith.constant dense<0.000000e+00> : vector<8x384xf32>
    %17 = tpu.matmul %14, %16, %cst_17 {dimension_numbers = #tpu.dot_dimension_numbers<[1], [0], [0], [1], [0, 0, 1, 1], [], []>} : vector<8x4xf32>, vector<4x384xf32>, vector<8x384xf32> -> vector<8x384xf32>
    %18 = arith.addf %12, %17 : vector<8x384xf32>
    %c3 = arith.constant 3 : index
    %c0_18 = arith.constant 0 : index
    %c0_19 = arith.constant 0 : index
    %19 = vector.load %arg2[%c3, %c0_18, %c0_19] : memref<9x8x4xf32, #tpu.memory_space<vmem>>, vector<1x8x4xf32>
    %20 = vector.shape_cast %19 : vector<1x8x4xf32> to vector<8x4xf32>
    %c0_20 = arith.constant 0 : index
    %c0_21 = arith.constant 0 : index
    %c18 = arith.constant 18 : index
    %21 = vector.load %arg1[%c0_20, %c0_21, %c18] : memref<1x4x512xf32, #tpu.memory_space<vmem>>, vector<1x4x384xf32>
    %22 = vector.shape_cast %21 : vector<1x4x384xf32> to vector<4x384xf32>
    %cst_22 = arith.constant dense<0.000000e+00> : vector<8x384xf32>
    %23 = tpu.matmul %20, %22, %cst_22 {dimension_numbers = #tpu.dot_dimension_numbers<[1], [0], [0], [1], [0, 0, 1, 1], [], []>} : vector<8x4xf32>, vector<4x384xf32>, vector<8x384xf32> -> vector<8x384xf32>
    %24 = arith.addf %18, %23 : vector<8x384xf32>
    %c4 = arith.constant 4 : index
    %c0_23 = arith.constant 0 : index
    %c0_24 = arith.constant 0 : index
    %25 = vector.load %arg2[%c4, %c0_23, %c0_24] : memref<9x8x4xf32, #tpu.memory_space<vmem>>, vector<1x8x4xf32>
    %26 = vector.shape_cast %25 : vector<1x8x4xf32> to vector<8x4xf32>
    %c0_25 = arith.constant 0 : index
    %c0_26 = arith.constant 0 : index
    %c19 = arith.constant 19 : index
    %27 = vector.load %arg1[%c0_25, %c0_26, %c19] : memref<1x4x512xf32, #tpu.memory_space<vmem>>, vector<1x4x384xf32>
    %28 = vector.shape_cast %27 : vector<1x4x384xf32> to vector<4x384xf32>
    %cst_27 = arith.constant dense<0.000000e+00> : vector<8x384xf32>
    %29 = tpu.matmul %26, %28, %cst_27 {dimension_numbers = #tpu.dot_dimension_numbers<[1], [0], [0], [1], [0, 0, 1, 1], [], []>} : vector<8x4xf32>, vector<4x384xf32>, vector<8x384xf32> -> vector<8x384xf32>
    %30 = arith.addf %24, %29 : vector<8x384xf32>
    %c5 = arith.constant 5 : index
    %c0_28 = arith.constant 0 : index
    %c0_29 = arith.constant 0 : index
    %31 = vector.load %arg2[%c5, %c0_28, %c0_29] : memref<9x8x4xf32, #tpu.memory_space<vmem>>, vector<1x8x4xf32>
    %32 = vector.shape_cast %31 : vector<1x8x4xf32> to vector<8x4xf32>
    %c0_30 = arith.constant 0 : index
    %c0_31 = arith.constant 0 : index
    %c20 = arith.constant 20 : index
    %33 = vector.load %arg1[%c0_30, %c0_31, %c20] : memref<1x4x512xf32, #tpu.memory_space<vmem>>, vector<1x4x384xf32>
    %34 = vector.shape_cast %33 : vector<1x4x384xf32> to vector<4x384xf32>
    %cst_32 = arith.constant dense<0.000000e+00> : vector<8x384xf32>
    %35 = tpu.matmul %32, %34, %cst_32 {dimension_numbers = #tpu.dot_dimension_numbers<[1], [0], [0], [1], [0, 0, 1, 1], [], []>} : vector<8x4xf32>, vector<4x384xf32>, vector<8x384xf32> -> vector<8x384xf32>
    %36 = arith.addf %30, %35 : vector<8x384xf32>
    %c6 = arith.constant 6 : index
    %c0_33 = arith.constant 0 : index
    %c0_34 = arith.constant 0 : index
    %37 = vector.load %arg2[%c6, %c0_33, %c0_34] : memref<9x8x4xf32, #tpu.memory_space<vmem>>, vector<1x8x4xf32>
    %38 = vector.shape_cast %37 : vector<1x8x4xf32> to vector<8x4xf32>
    %c0_35 = arith.constant 0 : index
    %c0_36 = arith.constant 0 : index
    %c36 = arith.constant 36 : index
    %39 = vector.load %arg1[%c0_35, %c0_36, %c36] : memref<1x4x512xf32, #tpu.memory_space<vmem>>, vector<1x4x384xf32>
    %40 = vector.shape_cast %39 : vector<1x4x384xf32> to vector<4x384xf32>
    %cst_37 = arith.constant dense<0.000000e+00> : vector<8x384xf32>
    %41 = tpu.matmul %38, %40, %cst_37 {dimension_numbers = #tpu.dot_dimension_numbers<[1], [0], [0], [1], [0, 0, 1, 1], [], []>} : vector<8x4xf32>, vector<4x384xf32>, vector<8x384xf32> -> vector<8x384xf32>
    %42 = arith.addf %36, %41 : vector<8x384xf32>
    %c7 = arith.constant 7 : index
    %c0_38 = arith.constant 0 : index
    %c0_39 = arith.constant 0 : index
    %43 = vector.load %arg2[%c7, %c0_38, %c0_39] : memref<9x8x4xf32, #tpu.memory_space<vmem>>, vector<1x8x4xf32>
    %44 = vector.shape_cast %43 : vector<1x8x4xf32> to vector<8x4xf32>
    %c0_40 = arith.constant 0 : index
    %c0_41 = arith.constant 0 : index
    %c37 = arith.constant 37 : index
    %45 = vector.load %arg1[%c0_40, %c0_41, %c37] : memref<1x4x512xf32, #tpu.memory_space<vmem>>, vector<1x4x384xf32>
    %46 = vector.shape_cast %45 : vector<1x4x384xf32> to vector<4x384xf32>
    %cst_42 = arith.constant dense<0.000000e+00> : vector<8x384xf32>
    %47 = tpu.matmul %44, %46, %cst_42 {dimension_numbers = #tpu.dot_dimension_numbers<[1], [0], [0], [1], [0, 0, 1, 1], [], []>} : vector<8x4xf32>, vector<4x384xf32>, vector<8x384xf32> -> vector<8x384xf32>
    %48 = arith.addf %42, %47 : vector<8x384xf32>
    %c8 = arith.constant 8 : index
    %c0_43 = arith.constant 0 : index
    %c0_44 = arith.constant 0 : index
    %49 = vector.load %arg2[%c8, %c0_43, %c0_44] : memref<9x8x4xf32, #tpu.memory_space<vmem>>, vector<1x8x4xf32>
    %50 = vector.shape_cast %49 : vector<1x8x4xf32> to vector<8x4xf32>
    %c0_45 = arith.constant 0 : index
    %c0_46 = arith.constant 0 : index
    %c38 = arith.constant 38 : index
    %51 = vector.load %arg1[%c0_45, %c0_46, %c38] : memref<1x4x512xf32, #tpu.memory_space<vmem>>, vector<1x4x384xf32>
    %52 = vector.shape_cast %51 : vector<1x4x384xf32> to vector<4x384xf32>
    %cst_47 = arith.constant dense<0.000000e+00> : vector<8x384xf32>
    %53 = tpu.matmul %50, %52, %cst_47 {dimension_numbers = #tpu.dot_dimension_numbers<[1], [0], [0], [1], [0, 0, 1, 1], [], []>} : vector<8x4xf32>, vector<4x384xf32>, vector<8x384xf32> -> vector<8x384xf32>
    %54 = arith.addf %48, %53 : vector<8x384xf32>
    %c0_48 = arith.constant 0 : index
    %c0_49 = arith.constant 0 : index
    %c0_50 = arith.constant 0 : index
    %55 = vector.load %arg3[%c0_48, %c0_49, %c0_50] : memref<1x8x384xf32, #tpu.memory_space<vmem>>, vector<1x8x384xf32>
    %56 = vector.shape_cast %55 : vector<1x8x384xf32> to vector<8x384xf32>
    %57 = vector.shape_cast %54 : vector<8x384xf32> to vector<1x8x384xf32>
    tpu.vector_store %arg3[%c0_48, %c0_49, %c0_50], %57 {strides = array<i32>} : memref<1x8x384xf32, #tpu.memory_space<vmem>>, vector<1x8x384xf32>,
    return
  }
  func.func @transform_0(%arg0: i32) -> (i32, i32, i32) {
    %c0_i32 = arith.constant 0 : i32
    %c0_i32_0 = arith.constant 0 : i32
    %c0_i32_1 = arith.constant 0 : i32
    return %arg0, %c0_i32, %c0_i32_0 : i32, i32, i32
  }
  func.func @transform_1(%arg0: i32) -> (i32, i32, i32) {
    %c0_i32 = arith.constant 0 : i32
    %c0_i32_0 = arith.constant 0 : i32
    %c0_i32_1 = arith.constant 0 : i32
    %c0_i32_2 = arith.constant 0 : i32
    return %c0_i32, %c0_i32_0, %c0_i32_1 : i32, i32, i32
  }
  func.func @transform_2(%arg0: i32) -> (i32, i32, i32) {
    %c0_i32 = arith.constant 0 : i32
    %c0_i32_0 = arith.constant 0 : i32
    %c0_i32_1 = arith.constant 0 : i32
    return %arg0, %c0_i32, %c0_i32_0 : i32, i32, i32
  }
}

</mosaic_0001>

<llo_original>
// kernel: tpu_custom_call.1
$region0: #{tpu_custom_call.1}
  #allocation0 [shape = 'u32[]', space=smem, size = 0x4, offset = 0x4, fixed_abs, tag = 'smem constant byte address 0x4 - core index']
  #allocation1 [shape = 'u32[144,128]{1,0:T(1,128)}', space=vmem, size = 0x12000, scoped, tag = 'internal scratch']
  %s0 = inlined_call_operand.vmem [shape: f32[2,4,512], index: 0, kind: input, shape index: {}]
  %s1 = inlined_call_operand.vmem [shape: f32[9,8,4], index: 1, kind: input, shape index: {}]
  %s2 = inlined_call_operand.hbm [shape: f32[2,8,384], index: 2, kind: output, shape index: {}]
  %s3 = sld [smem:[#allocation0]]
  $region41: #{tpu_custom_call.1} parent=0
    _
  %s5 = ssub.s32 1, %s3
  %s6 = scalar_select 0, %s5, %s3
  $region1: #{tpu_custom_call.1} parent=0
    #allocation2 [shape = 'u8[24576]{0}', space=vmem, size = 0x6000, scoped, tag = 'output window, operand 0']
    #allocation3 [shape = 's32[2]{0}', space=sflag, size = 0x8, scoped, tag = 'scoped memory for tpu_custom_call.1']
    %7 = vsyncpa [#allocation3], 0
    %s8 = scalar_lea.sflag [#allocation3], 1
    %9 = vsyncpa %s8, 0
    loop: start=0, step=1, limit=4
    $region2: #{tpu_custom_call.1} parent=1 // loop_pre_header
      _
    $region3: #{tpu_custom_call.1} parent=1 // loop_header
      %s11 = sphi 0, %s15
      %p12 = scmp.ge.s32.totalorder %s11, 4
      %s21 = sphi 0, %s23
      %s24 = sphi 0, %s21
      %s25 = sphi 0, %s24
      %s41 = sphi 0, %s25
      %s45 = sphi 0, %s45
      %s47 = sphi 0, %s45
      %s48 = sphi 0, %s47
      %s62 = sphi 0, %s48
      %s68 = sphi 0, %s70
      %s71 = sphi 0, %s68
      %s72 = sphi 0, %s71
      %s88 = sphi 0, %s72
    $region4: #{tpu_custom_call.1} parent=1 // loop_header_branch
      %14 = sbr.rel (%p12) target = $region8
    $region5: #{tpu_custom_call.1} parent=1 // loop_body
      %s16 = ssub.s32 %s11, 1
      %s17 = ssub.s32 %s11, 2
      %s18 = sadd.s32 %s11, 1
      %s19 = ssub.s32 %s11, %s18
      %p20 = scmp.eq.s32.totalorder %s19, 0
      %s22 = sadd.s32 %s21, 1
      %s23 = scalar_select %p20, %s21, %s22
      %p26 = pneg %p20
      %p27 = scmp.eq.s32.totalorder %s11, 1
      %p28 = por %p26, %p27
      %p29 = scmp.ne.s32.totalorder %s21, %s24
      %p30 = scmp.eq.s32.totalorder %s11, 0
      %p31 = por %p29, %p30
      %p32 = scmp.ne.s32.totalorder %s21, %s24
      %p33 = scmp.eq.s32.totalorder %s16, 1
      %p34 = por %p32, %p33
      %p35 = scmp.ne.s32.totalorder %s24, %s25
      %p36 = scmp.eq.s32.totalorder %s16, 0
      %p37 = por %p35, %p36
      %p38 = scmp.ne.s32.totalorder %s24, %s25
      %p39 = scmp.eq.s32.totalorder %s17, 1
      %p40 = por %p38, %p39
      %p42 = scmp.ne.s32.totalorder %s25, %s41
      %p43 = scmp.eq.s32.totalorder %s17, 0
      %p44 = por %p42, %p43
      %s46 = sadd.s32 %s45, 1
      %p49 = scmp.eq.s32.totalorder %s11, 1
      %p50 = scmp.ne.s32.totalorder %s45, %s47
      %p51 = scmp.eq.s32.totalorder %s11, 0
      %p52 = por %p50, %p51
      %p53 = scmp.ne.s32.totalorder %s45, %s47
      %p54 = scmp.eq.s32.totalorder %s16, 1
      %p55 = por %p53, %p54
      %p56 = scmp.ne.s32.totalorder %s47, %s48
      %p57 = scmp.eq.s32.totalorder %s16, 0
      %p58 = por %p56, %p57
      %p59 = scmp.ne.s32.totalorder %s47, %s48
      %p60 = scmp.eq.s32.totalorder %s17, 1
      %p61 = por %p59, %p60
      %p63 = scmp.ne.s32.totalorder %s48, %s62
      %p64 = scmp.eq.s32.totalorder %s17, 0
      %p65 = por %p63, %p64
      %s66 = ssub.s32 %s11, %s18
      %p67 = scmp.eq.s32.totalorder %s66, 0
      %s69 = sadd.s32 %s68, 1
      %s70 = scalar_select %p67, %s68, %s69
      %p73 = pneg %p67
      %p74 = scmp.eq.s32.totalorder %s11, 1
      %p75 = por %p73, %p74
      %p76 = scmp.ne.s32.totalorder %s68, %s71
      %p77 = scmp.eq.s32.totalorder %s11, 0
      %p78 = por %p76, %p77
      %p79 = scmp.ne.s32.totalorder %s68, %s71
      %p80 = scmp.eq.s32.totalorder %s16, 1
      %p81 = por %p79, %p80
      %p82 = scmp.ne.s32.totalorder %s71, %s72
      %p83 = scmp.eq.s32.totalorder %s16, 0
      %p84 = por %p82, %p83
      %p85 = scmp.ne.s32.totalorder %s71, %s72
      %p86 = scmp.eq.s32.totalorder %s17, 1
      %p87 = por %p85, %p86
      %p89 = scmp.ne.s32.totalorder %s72, %s88
      %p90 = scmp.eq.s32.totalorder %s17, 0
      %p91 = por %p89, %p90
      %p92 = scmp.le.s32.totalorder 1, %s11
      %p93 = scmp.lt.s32.totalorder %s11, 3
      %p94 = pnand %p92, %p93
      %p95 = pneg %p94
      // Predicated region
      $region9: #{tpu_custom_call.1} parent=5 // pred_check
        _
      $region10: #{tpu_custom_call.1} parent=5 // pred_check_branch
        %97 = sbr.rel (%p94) target = $region12
      $region11: #{tpu_custom_call.1} parent=5 // pred_region
        %s98 = ssub.s32 %s11, 1
        // Predicated region
        $region13: #{tpu_custom_call.1} parent=11 // pred_check
          %p99 = pneg %p58
        $region14: #{tpu_custom_call.1} parent=11 // pred_check_branch
          %101 = sbr.rel (%p99) target = $region16
        $region15: #{tpu_custom_call.1} parent=11 // pred_region
          _
        $region16: #{tpu_custom_call.1} parent=11 // pred_fallthru
          _
      $region12: #{tpu_custom_call.1} parent=5 // pred_fallthru
        _
      %p102 = scmp.lt.s32.totalorder %s11, 2
      // Predicated region
      $region17: #{tpu_custom_call.1} parent=5 // pred_check
        %p103 = pneg %p102
      $region18: #{tpu_custom_call.1} parent=5 // pred_check_branch
        %105 = sbr.rel (%p103) target = $region20
      $region19: #{tpu_custom_call.1} parent=5 // pred_region
        // Predicated region
        $region21: #{tpu_custom_call.1} parent=19 // pred_check
          %p106 = pneg %p31
        $region22: #{tpu_custom_call.1} parent=19 // pred_check_branch
          %108 = sbr.rel (%p106) target = $region24
        $region23: #{tpu_custom_call.1} parent=19 // pred_region
          %p109 = scmp.lt.s32.totalorder %s11, 1
          %s110 = scalar_select %p109, %s11, 1
          %s111 = smul.addr %s110, 4
          %s112 = smul.addr %s111, 4
          %s113 = scalar_lea.vmem %s0, %s112
        $region24: #{tpu_custom_call.1} parent=19 // pred_fallthru
          _
      $region20: #{tpu_custom_call.1} parent=5 // pred_fallthru
        _
      %p114 = scmp.le.s32.totalorder 1, %s11
      %p115 = scmp.lt.s32.totalorder %s11, 3
      %p116 = pnand %p114, %p115
      %p117 = pneg %p116
      // Predicated region
      $region25: #{tpu_custom_call.1} parent=5 // pred_check
        _
      $region26: #{tpu_custom_call.1} parent=5 // pred_check_branch
        %119 = sbr.rel (%p116) target = $region28
      $region27: #{tpu_custom_call.1} parent=5 // pred_region
        %s120 = ssub.s32 %s11, 1
        %p121 = scmp.lt.s32.totalorder %s16, 1
        %s122 = scalar_select %p121, %s16, 1
        %s123 = smul.addr %s122, 4
        %s124 = smul.addr %s123, 4
        %s125 = scalar_lea.vmem %s0, %s124
        %p126 = pneg %p37
        %p127 = pneg %p34
        %p128 = pneg %p58
        %p129 = pneg %p55
        %p130 = pneg %p84
        %p131 = pneg %p81
        %s132 = sand.u32 %s71, 1
        %s133 = scalar_lea.sflag [#allocation3], %s132
        %s134 = sand.u32 %s71, 1
        %s135 = smul.addr %s134, 24
        %s136 = scalar_lea.vmem [#allocation2], %s135
        %p137 = scmp.lt.s32.totalorder %s16, 1
        %s138 = scalar_select %p137, %s16, 1
        %s139 = smul.addr %s138, 4
        %s140 = smul.addr %s139, 4
        %s141 = scalar_lea.vmem %s0, %s140
        %v142 = vld [vmem:[%s1] sm:$0xff]
        %v143 = vld [vmem:[%s141] sm:$0xff]
        %v144 = vld [vmem:[%s141 + $0x8] sm:$0xf]
        %s145 = scalar_lea.vmem %s1, 8
        %v146 = vld [vmem:[%s145] sm:$0xff]
        %v147 = vld [vmem:[%s141] sm:$0xff]
        %v148 = vld [vmem:[%s141 + $0x8] sm:$0xff]
        %v151 = vcombine.high %v147, %v147
        %v152 = vcombine.high %v148, %v148
        %153 = vrot.lane.b32.xlu0 %v147, 127
        %v154 = vpop.permute.xlu0 %153
        %155 = vrot.lane.b32.xlu0 %v151, 127
        %v156 = vpop.permute.xlu0 %155
        %157 = vrot.lane.b32.xlu0 %v148, 127
        %v158 = vpop.permute.xlu0 %157
        %159 = vrot.lane.b32.xlu0 %v152, 127
        %v160 = vpop.permute.xlu0 %159
        %vm161 = vcmask 1039360
        %v162 = vsel %vm161, %v154, %v156
        %v163 = vsel %vm161, %v156, %v158
        %v164 = vsel %vm161, %v158, %v160
        %vm165 = vcmask 31744
        %v167 = vsel %vm165, %v146, 0
        %vm169 = vcmask 1043456
        %v170 = vsel %vm169, %v162, 0
        %v172 = vsel %vm169, %v163, 0
        %v174 = vsel %vm169, %v164, 0
        %176 = vmatprep.subr.mxu0 %v172
        %177 = vmatpush1.msra.mxu0 %v170
        %178 = vmatprep.subr.mxu0 0.0
        %179 = vmatpush1.msra.mxu0 0.0
        %180 = vmatprep.subr.mxu0 0.0
        %181 = vmatpush1.msra.mxu0 0.0
        %182 = vmatprep.subr.mxu0 0.0
        %183 = vmatpush1.msra.mxu0 0.0
        %184 = vmatprep.subr.mxu0 0.0
        %185 = vmatpush1.msra.mxu0 0.0
        %186 = vmatprep.subr.mxu0 0.0
        %187 = vmatpush1.msra.mxu0 0.0
        %188 = vmatprep.subr.mxu0 0.0
        %189 = vmatpush1.msra.mxu0 0.0
        %190 = vmatprep.subr.mxu0 0.0
        %191 = vmatpush1.msra.mxu0 0.0
        %192 = vmatprep.subr.mxu0 0.0
        %193 = vmatpush1.msra.mxu0 0.0
        %194 = vmatprep.subr.mxu0 0.0
        %195 = vmatpush1.msra.mxu0 0.0
        %196 = vmatprep.subr.mxu0 0.0
        %197 = vmatpush1.msra.mxu0 0.0
        %198 = vmatprep.subr.mxu0 0.0
        %199 = vmatpush1.msra.mxu0 0.0
        %200 = vmatprep.subr.mxu0 0.0
        %201 = vmatpush1.msra.mxu0 0.0
        %202 = vmatprep.subr.mxu0 0.0
        %203 = vmatpush1.msra.mxu0 0.0
        %204 = vmatprep.subr.mxu0 0.0
        %205 = vmatpush1.msra.mxu0 0.0
        %206 = vmatprep.subr.mxu0 0.0
        %207 = vmatpush1.msra.mxu0 0.0
        %208 = vmatprep.subr.mxu0 0.0
        %209 = vmatpush1.msra.mxu0 0.0
        %210 = vmatprep.subr.mxu0 0.0
        %211 = vmatpush1.msra.mxu0 0.0
        %212 = vmatprep.subr.mxu0 0.0
        %213 = vmatpush1.msra.mxu0 0.0
        %214 = vmatprep.subr.mxu0 0.0
        %215 = vmatpush1.msra.mxu0 0.0
        %216 = vmatprep.subr.mxu0 0.0
        %217 = vmatpush1.msra.mxu0 0.0
        %218 = vmatprep.subr.mxu0 0.0
        %219 = vmatpush1.msra.mxu0 0.0
        %220 = vmatprep.subr.mxu0 0.0
        %221 = vmatpush1.msra.mxu0 0.0
        %222 = vmatprep.subr.mxu0 0.0
        %223 = vmatpush1.msra.mxu0 0.0
        %224 = vmatprep.subr.mxu0 0.0
        %225 = vmatpush1.msra.mxu0 0.0
        %226 = vmatprep.subr.mxu0 0.0
        %227 = vmatpush1.msra.mxu0 0.0
        %228 = vmatprep.subr.mxu0 0.0
        %229 = vmatpush1.msra.mxu0 0.0
        %230 = vmatprep.subr.mxu0 0.0
        %231 = vmatpush1.msra.mxu0 0.0
        %232 = vmatprep.subr.mxu0 0.0
        %233 = vmatpush1.msra.mxu0 0.0
        %234 = vmatprep.subr.mxu0 0.0
        %235 = vmatpush1.msra.mxu0 0.0
        %236 = vmatprep.subr.mxu0 0.0
        %237 = vmatpush1.msra.mxu0 0.0
        %238 = vmatprep.subr.mxu0 0.0
        %239 = vmatpush1.msra.mxu0 0.0
        %240 = vmatprep.mubr.f32.mxu0 0.0
        %241 = vmatmul.mubr.f32.gmra.mrb[0].mxu0 %v167
        %v242 = vpop.f32.mrb[0].mxu0
        %v243 = vadd.f32 0.0, %v242
        %v244 = vpop.f32.mrb[0].mxu0
        %v245 = vadd.f32 0.0, %v244
        %246 = vdwg.mxu0
        %247 = vmatprep.subr.mxu0 0.0
        %248 = vmatpush1.msra.mxu0 %v174
        %249 = vmatprep.subr.mxu0 0.0
        %250 = vmatpush1.msra.mxu0 0.0
        %251 = vmatprep.subr.mxu0 0.0
        %252 = vmatpush1.msra.mxu0 0.0
        %253 = vmatprep.subr.mxu0 0.0
        %254 = vmatpush1.msra.mxu0 0.0
        %255 = vmatprep.subr.mxu0 0.0
        %256 = vmatpush1.msra.mxu0 0.0
        %257 = vmatprep.subr.mxu0 0.0
        %258 = vmatpush1.msra.mxu0 0.0
        %259 = vmatprep.subr.mxu0 0.0
        %260 = vmatpush1.msra.mxu0 0.0
        %261 = vmatprep.subr.mxu0 0.0
        %262 = vmatpush1.msra.mxu0 0.0
        %263 = vmatprep.subr.mxu0 0.0
        %264 = vmatpush1.msra.mxu0 0.0
        %265 = vmatprep.subr.mxu0 0.0
        %266 = vmatpush1.msra.mxu0 0.0
        %267 = vmatprep.subr.mxu0 0.0
        %268 = vmatpush1.msra.mxu0 0.0
        %269 = vmatprep.subr.mxu0 0.0
        %270 = vmatpush1.msra.mxu0 0.0
        %271 = vmatprep.subr.mxu0 0.0
        %272 = vmatpush1.msra.mxu0 0.0
        %273 = vmatprep.subr.mxu0 0.0
        %274 = vmatpush1.msra.mxu0 0.0
        %275 = vmatprep.subr.mxu0 0.0
        %276 = vmatpush1.msra.mxu0 0.0
        %277 = vmatprep.subr.mxu0 0.0
        %278 = vmatpush1.msra.mxu0 0.0
        %279 = vmatprep.subr.mxu0 0.0
        %280 = vmatpush1.msra.mxu0 0.0
        %281 = vmatprep.subr.mxu0 0.0
        %282 = vmatpush1.msra.mxu0 0.0
        %283 = vmatprep.subr.mxu0 0.0
        %284 = vmatpush1.msra.mxu0 0.0
        %285 = vmatprep.subr.mxu0 0.0
        %286 = vmatpush1.msra.mxu0 0.0
        %287 = vmatprep.subr.mxu0 0.0
        %288 = vmatpush1.msra.mxu0 0.0
        %289 = vmatprep.subr.mxu0 0.0
        %290 = vmatpush1.msra.mxu0 0.0
        %291 = vmatprep.subr.mxu0 0.0
        %292 = vmatpush1.msra.mxu0 0.0
        %293 = vmatprep.subr.mxu0 0.0
        %294 = vmatpush1.msra.mxu0 0.0
        %295 = vmatprep.subr.mxu0 0.0
        %296 = vmatpush1.msra.mxu0 0.0
        %297 = vmatprep.subr.mxu0 0.0
        %298 = vmatpush1.msra.mxu0 0.0
        %299 = vmatprep.subr.mxu0 0.0
        %300 = vmatpush1.msra.mxu0 0.0
        %301 = vmatprep.subr.mxu0 0.0
        %302 = vmatpush1.msra.mxu0 0.0
        %303 = vmatprep.subr.mxu0 0.0
        %304 = vmatpush1.msra.mxu0 0.0
        %305 = vmatprep.subr.mxu0 0.0
        %306 = vmatpush1.msra.mxu0 0.0
        %307 = vmatprep.subr.mxu0 0.0
        %308 = vmatpush1.msra.mxu0 0.0
        %309 = vmatprep.subr.mxu0 0.0
        %310 = vmatpush1.msra.mxu0 0.0
        %311 = vmatprep.mubr.f32.mxu0 0.0
        %312 = vmatmul.mubr.f32.gmra.mrb[0].mxu0 %v167
        %v313 = vpop.f32.mrb[0].mxu0
        %v314 = vadd.f32 0.0, %v313
        %v315 = vpop.f32.mrb[0].mxu0
        %316 = vdwg.mxu0
        %v319 = vcombine.high %v143, %v143
        %v321 = vsel %vm165, %v142, 0
        %v323 = vsel %vm169, %v143, 0
        %v325 = vsel %vm169, %v319, 0
        %v327 = vsel %vm169, %v144, 0
        %329 = vmatprep.subr.mxu0 %v325
        %330 = vmatpush1.msra.mxu0 %v323
        %331 = vmatprep.subr.mxu0 0.0
        %332 = vmatpush1.msra.mxu0 0.0
        %333 = vmatprep.subr.mxu0 0.0
        %334 = vmatpush1.msra.mxu0 0.0
        %335 = vmatprep.subr.mxu0 0.0
        %336 = vmatpush1.msra.mxu0 0.0
        %337 = vmatprep.subr.mxu0 0.0
        %338 = vmatpush1.msra.mxu0 0.0
        %339 = vmatprep.subr.mxu0 0.0
        %340 = vmatpush1.msra.mxu0 0.0
        %341 = vmatprep.subr.mxu0 0.0
        %342 = vmatpush1.msra.mxu0 0.0
        %343 = vmatprep.subr.mxu0 0.0
        %344 = vmatpush1.msra.mxu0 0.0
        %345 = vmatprep.subr.mxu0 0.0
        %346 = vmatpush1.msra.mxu0 0.0
        %347 = vmatprep.subr.mxu0 0.0
        %348 = vmatpush1.msra.mxu0 0.0
        %349 = vmatprep.subr.mxu0 0.0
        %350 = vmatpush1.msra.mxu0 0.0
        %351 = vmatprep.subr.mxu0 0.0
        %352 = vmatpush1.msra.mxu0 0.0
        %353 = vmatprep.subr.mxu0 0.0
        %354 = vmatpush1.msra.mxu0 0.0
        %355 = vmatprep.subr.mxu0 0.0
        %356 = vmatpush1.msra.mxu0 0.0
        %357 = vmatprep.subr.mxu0 0.0
        %358 = vmatpush1.msra.mxu0 0.0
        %359 = vmatprep.subr.mxu0 0.0
        %360 = vmatpush1.msra.mxu0 0.0
        %361 = vmatprep.subr.mxu0 0.0
        %362 = vmatpush1.msra.mxu0 0.0
        %363 = vmatprep.subr.mxu0 0.0
        %364 = vmatpush1.msra.mxu0 0.0
        %365 = vmatprep.subr.mxu0 0.0
        %366 = vmatpush1.msra.mxu0 0.0
        %367 = vmatprep.subr.mxu0 0.0
        %368 = vmatpush1.msra.mxu0 0.0
        %369 = vmatprep.subr.mxu0 0.0
        %370 = vmatpush1.msra.mxu0 0.0
        %371 = vmatprep.subr.mxu0 0.0
        %372 = vmatpush1.msra.mxu0 0.0
        %373 = vmatprep.subr.mxu0 0.0
        %374 = vmatpush1.msra.mxu0 0.0
        %375 = vmatprep.subr.mxu0 0.0
        %376 = vmatpush1.msra.mxu0 0.0
        %377 = vmatprep.subr.mxu0 0.0
        %378 = vmatpush1.msra.mxu0 0.0
        %379 = vmatprep.subr.mxu0 0.0
        %380 = vmatpush1.msra.mxu0 0.0
        %381 = vmatprep.subr.mxu0 0.0
        %382 = vmatpush1.msra.mxu0 0.0
        %383 = vmatprep.subr.mxu0 0.0
        %384 = vmatpush1.msra.mxu0 0.0
        %385 = vmatprep.subr.mxu0 0.0
        %386 = vmatpush1.msra.mxu0 0.0
        %387 = vmatprep.subr.mxu0 0.0
        %388 = vmatpush1.msra.mxu0 0.0
        %389 = vmatprep.subr.mxu0 0.0
        %390 = vmatpush1.msra.mxu0 0.0
        %391 = vmatprep.subr.mxu0 0.0
        %392 = vmatpush1.msra.mxu0 0.0
        %393 = vmatprep.mubr.f32.mxu0 0.0
        %394 = vmatmul.mubr.f32.gmra.mrb[0].mxu0 %v321
        %v395 = vpop.f32.mrb[0].mxu0
        %v396 = vadd.f32 %v243, %v395
        %v397 = vpop.f32.mrb[0].mxu0
        %v398 = vadd.f32 %v245, %v397
        %399 = vdwg.mxu0
        %400 = vmatprep.subr.mxu0 0.0
        %401 = vmatpush1.msra.mxu0 %v327
        %402 = vmatprep.subr.mxu0 0.0
        %403 = vmatpush1.msra.mxu0 0.0
        %404 = vmatprep.subr.mxu0 0.0
        %405 = vmatpush1.msra.mxu0 0.0
        %406 = vmatprep.subr.mxu0 0.0
        %407 = vmatpush1.msra.mxu0 0.0
        %408 = vmatprep.subr.mxu0 0.0
        %409 = vmatpush1.msra.mxu0 0.0
        %410 = vmatprep.subr.mxu0 0.0
        %411 = vmatpush1.msra.mxu0 0.0
        %412 = vmatprep.subr.mxu0 0.0
        %413 = vmatpush1.msra.mxu0 0.0
        %414 = vmatprep.subr.mxu0 0.0
        %415 = vmatpush1.msra.mxu0 0.0
        %416 = vmatprep.subr.mxu0 0.0
        %417 = vmatpush1.msra.mxu0 0.0
        %418 = vmatprep.subr.mxu0 0.0
        %419 = vmatpush1.msra.mxu0 0.0
        %420 = vmatprep.subr.mxu0 0.0
        %421 = vmatpush1.msra.mxu0 0.0
        %422 = vmatprep.subr.mxu0 0.0
        %423 = vmatpush1.msra.mxu0 0.0
        %424 = vmatprep.subr.mxu0 0.0
        %425 = vmatpush1.msra.mxu0 0.0
        %426 = vmatprep.subr.mxu0 0.0
        %427 = vmatpush1.msra.mxu0 0.0
        %428 = vmatprep.subr.mxu0 0.0
        %429 = vmatpush1.msra.mxu0 0.0
        %430 = vmatprep.subr.mxu0 0.0
        %431 = vmatpush1.msra.mxu0 0.0
        %432 = vmatprep.subr.mxu0 0.0
        %433 = vmatpush1.msra.mxu0 0.0
        %434 = vmatprep.subr.mxu0 0.0
        %435 = vmatpush1.msra.mxu0 0.0
        %436 = vmatprep.subr.mxu0 0.0
        %437 = vmatpush1.msra.mxu0 0.0
        %438 = vmatprep.subr.mxu0 0.0
        %439 = vmatpush1.msra.mxu0 0.0
        %440 = vmatprep.subr.mxu0 0.0
        %441 = vmatpush1.msra.mxu0 0.0
        %442 = vmatprep.subr.mxu0 0.0
        %443 = vmatpush1.msra.mxu0 0.0
        %444 = vmatprep.subr.mxu0 0.0
        %445 = vmatpush1.msra.mxu0 0.0
        %446 = vmatprep.subr.mxu0 0.0
        %447 = vmatpush1.msra.mxu0 0.0
        %448 = vmatprep.subr.mxu0 0.0
        %449 = vmatpush1.msra.mxu0 0.0
        %450 = vmatprep.subr.mxu0 0.0
        %451 = vmatpush1.msra.mxu0 0.0
        %452 = vmatprep.subr.mxu0 0.0
        %453 = vmatpush1.msra.mxu0 0.0
        %454 = vmatprep.subr.mxu0 0.0
        %455 = vmatpush1.msra.mxu0 0.0
        %456 = vmatprep.subr.mxu0 0.0
        %457 = vmatpush1.msra.mxu0 0.0
        %458 = vmatprep.subr.mxu0 0.0
        %459 = vmatpush1.msra.mxu0 0.0
        %460 = vmatprep.subr.mxu0 0.0
        %461 = vmatpush1.msra.mxu0 0.0
        %462 = vmatprep.subr.mxu0 0.0
        %463 = vmatpush1.msra.mxu0 0.0
        %464 = vmatprep.mubr.f32.mxu0 0.0
        %465 = vmatmul.mubr.f32.gmra.mrb[0].mxu0 %v321
        %v466 = vpop.f32.mrb[0].mxu0
        %v467 = vadd.f32 %v314, %v466
        %v468 = vpop.f32.mrb[0].mxu0
        %469 = vdwg.mxu0
        %s470 = scalar_lea.vmem %s1, 16
        %v471 = vld [vmem:[%s470] sm:$0xff]
        %v472 = vld [vmem:[%s141] sm:$0xff]
        %v473 = vld [vmem:[%s141 + $0x8] sm:$0xff]
        %v476 = vcombine.high %v472, %v472
        %v477 = vcombine.high %v473, %v473
        %478 = vrot.lane.b32.xlu0 %v472, 126
        %v479 = vpop.permute.xlu0 %478
        %480 = vrot.lane.b32.xlu0 %v476, 126
        %v481 = vpop.permute.xlu0 %480
        %482 = vrot.lane.b32.xlu0 %v473, 126
        %v483 = vpop.permute.xlu0 %482
        %484 = vrot.lane.b32.xlu0 %v477, 126
        %v485 = vpop.permute.xlu0 %484
        %vm486 = vcmask 1031168
        %v487 = vsel %vm486, %v479, %v481
        %v488 = vsel %vm486, %v481, %v483
        %v489 = vsel %vm486, %v483, %v485
        %v491 = vsel %vm165, %v471, 0
        %v493 = vsel %vm169, %v487, 0
        %v495 = vsel %vm169, %v488, 0
        %v497 = vsel %vm169, %v489, 0
        %499 = vmatprep.subr.mxu0 %v495
        %500 = vmatpush1.msra.mxu0 %v493
        %501 = vmatprep.subr.mxu0 0.0
        %502 = vmatpush1.msra.mxu0 0.0
        %503 = vmatprep.subr.mxu0 0.0
        %504 = vmatpush1.msra.mxu0 0.0
        %505 = vmatprep.subr.mxu0 0.0
        %506 = vmatpush1.msra.mxu0 0.0
        %507 = vmatprep.subr.mxu0 0.0
        %508 = vmatpush1.msra.mxu0 0.0
        %509 = vmatprep.subr.mxu0 0.0
        %510 = vmatpush1.msra.mxu0 0.0
        %511 = vmatprep.subr.mxu0 0.0
        %512 = vmatpush1.msra.mxu0 0.0
        %513 = vmatprep.subr.mxu0 0.0
        %514 = vmatpush1.msra.mxu0 0.0
        %515 = vmatprep.subr.mxu0 0.0
        %516 = vmatpush1.msra.mxu0 0.0
        %517 = vmatprep.subr.mxu0 0.0
        %518 = vmatpush1.msra.mxu0 0.0
        %519 = vmatprep.subr.mxu0 0.0
        %520 = vmatpush1.msra.mxu0 0.0
        %521 = vmatprep.subr.mxu0 0.0
        %522 = vmatpush1.msra.mxu0 0.0
        %523 = vmatprep.subr.mxu0 0.0
        %524 = vmatpush1.msra.mxu0 0.0
        %525 = vmatprep.subr.mxu0 0.0
        %526 = vmatpush1.msra.mxu0 0.0
        %527 = vmatprep.subr.mxu0 0.0
        %528 = vmatpush1.msra.mxu0 0.0
        %529 = vmatprep.subr.mxu0 0.0
        %530 = vmatpush1.msra.mxu0 0.0
        %531 = vmatprep.subr.mxu0 0.0
        %532 = vmatpush1.msra.mxu0 0.0
        %533 = vmatprep.subr.mxu0 0.0
        %534 = vmatpush1.msra.mxu0 0.0
        %535 = vmatprep.subr.mxu0 0.0
        %536 = vmatpush1.msra.mxu0 0.0
        %537 = vmatprep.subr.mxu0 0.0
        %538 = vmatpush1.msra.mxu0 0.0
        %539 = vmatprep.subr.mxu0 0.0
        %540 = vmatpush1.msra.mxu0 0.0
        %541 = vmatprep.subr.mxu0 0.0
        %542 = vmatpush1.msra.mxu0 0.0
        %543 = vmatprep.subr.mxu0 0.0
        %544 = vmatpush1.msra.mxu0 0.0
        %545 = vmatprep.subr.mxu0 0.0
        %546 = vmatpush1.msra.mxu0 0.0
        %547 = vmatprep.subr.mxu0 0.0
        %548 = vmatpush1.msra.mxu0 0.0
        %549 = vmatprep.subr.mxu0 0.0
        %550 = vmatpush1.msra.mxu0 0.0
        %551 = vmatprep.subr.mxu0 0.0
        %552 = vmatpush1.msra.mxu0 0.0
        %553 = vmatprep.subr.mxu0 0.0
        %554 = vmatpush1.msra.mxu0 0.0
        %555 = vmatprep.subr.mxu0 0.0
        %556 = vmatpush1.msra.mxu0 0.0
        %557 = vmatprep.subr.mxu0 0.0
        %558 = vmatpush1.msra.mxu0 0.0
        %559 = vmatprep.subr.mxu0 0.0
        %560 = vmatpush1.msra.mxu0 0.0
        %561 = vmatprep.subr.mxu0 0.0
        %562 = vmatpush1.msra.mxu0 0.0
        %563 = vmatprep.mubr.f32.mxu0 0.0
        %564 = vmatmul.mubr.f32.gmra.mrb[0].mxu0 %v491
        %v565 = vpop.f32.mrb[0].mxu0
        %v566 = vadd.f32 0.0, %v565
        %v567 = vpop.f32.mrb[0].mxu0
        %v568 = vadd.f32 0.0, %v567
        %569 = vdwg.mxu0
        %570 = vmatprep.subr.mxu0 0.0
        %571 = vmatpush1.msra.mxu0 %v497
        %572 = vmatprep.subr.mxu0 0.0
        %573 = vmatpush1.msra.mxu0 0.0
        %574 = vmatprep.subr.mxu0 0.0
        %575 = vmatpush1.msra.mxu0 0.0
        %576 = vmatprep.subr.mxu0 0.0
        %577 = vmatpush1.msra.mxu0 0.0
        %578 = vmatprep.subr.mxu0 0.0
        %579 = vmatpush1.msra.mxu0 0.0
        %580 = vmatprep.subr.mxu0 0.0
        %581 = vmatpush1.msra.mxu0 0.0
        %582 = vmatprep.subr.mxu0 0.0
        %583 = vmatpush1.msra.mxu0 0.0
        %584 = vmatprep.subr.mxu0 0.0
        %585 = vmatpush1.msra.mxu0 0.0
        %586 = vmatprep.subr.mxu0 0.0
        %587 = vmatpush1.msra.mxu0 0.0
        %588 = vmatprep.subr.mxu0 0.0
        %589 = vmatpush1.msra.mxu0 0.0
        %590 = vmatprep.subr.mxu0 0.0
        %591 = vmatpush1.msra.mxu0 0.0
        %592 = vmatprep.subr.mxu0 0.0
        %593 = vmatpush1.msra.mxu0 0.0
        %594 = vmatprep.subr.mxu0 0.0
        %595 = vmatpush1.msra.mxu0 0.0
        %596 = vmatprep.subr.mxu0 0.0
        %597 = vmatpush1.msra.mxu0 0.0
        %598 = vmatprep.subr.mxu0 0.0
        %599 = vmatpush1.msra.mxu0 0.0
        %600 = vmatprep.subr.mxu0 0.0
        %601 = vmatpush1.msra.mxu0 0.0
        %602 = vmatprep.subr.mxu0 0.0
        %603 = vmatpush1.msra.mxu0 0.0
        %604 = vmatprep.subr.mxu0 0.0
        %605 = vmatpush1.msra.mxu0 0.0
        %606 = vmatprep.subr.mxu0 0.0
        %607 = vmatpush1.msra.mxu0 0.0
        %608 = vmatprep.subr.mxu0 0.0
        %609 = vmatpush1.msra.mxu0 0.0
        %610 = vmatprep.subr.mxu0 0.0
        %611 = vmatpush1.msra.mxu0 0.0
        %612 = vmatprep.subr.mxu0 0.0
        %613 = vmatpush1.msra.mxu0 0.0
        %614 = vmatprep.subr.mxu0 0.0
        %615 = vmatpush1.msra.mxu0 0.0
        %616 = vmatprep.subr.mxu0 0.0
        %617 = vmatpush1.msra.mxu0 0.0
        %618 = vmatprep.subr.mxu0 0.0
        %619 = vmatpush1.msra.mxu0 0.0
        %620 = vmatprep.subr.mxu0 0.0
        %621 = vmatpush1.msra.mxu0 0.0
        %622 = vmatprep.subr.mxu0 0.0
        %623 = vmatpush1.msra.mxu0 0.0
        %624 = vmatprep.subr.mxu0 0.0
        %625 = vmatpush1.msra.mxu0 0.0
        %626 = vmatprep.subr.mxu0 0.0
        %627 = vmatpush1.msra.mxu0 0.0
        %628 = vmatprep.subr.mxu0 0.0
        %629 = vmatpush1.msra.mxu0 0.0
        %630 = vmatprep.subr.mxu0 0.0
        %631 = vmatpush1.msra.mxu0 0.0
        %632 = vmatprep.subr.mxu0 0.0
        %633 = vmatpush1.msra.mxu0 0.0
        %634 = vmatprep.mubr.f32.mxu0 0.0
        %635 = vmatmul.mubr.f32.gmra.mrb[0].mxu0 %v491
        %v636 = vpop.f32.mrb[0].mxu0
        %v637 = vadd.f32 0.0, %v636
        %v638 = vpop.f32.mrb[0].mxu0
        %639 = vdwg.mxu0
        %v640 = vadd.f32 %v396, %v566
        %v641 = vadd.f32 %v398, %v568
        %v642 = vadd.f32 %v467, %v637
        %s643 = scalar_lea.vmem %s1, 24
        %v644 = vld [vmem:[%s643] sm:$0xff]
        %v645 = vld [vmem:[%s141] sm:$0xff]
        %v646 = vld [vmem:[%s141 + $0x8] sm:$0xff]
        %v649 = vcombine.high %v645, %v645
        %v650 = vcombine.high %v646, %v646
        %651 = vrot.lane.b32.xlu0 %v645, 110
        %v652 = vpop.permute.xlu0 %651
        %653 = vrot.lane.b32.xlu0 %v649, 110
        %v654 = vpop.permute.xlu0 %653
        %655 = vrot.lane.b32.xlu0 %v646, 110
        %v656 = vpop.permute.xlu0 %655
        %657 = vrot.lane.b32.xlu0 %v650, 110
        %v658 = vpop.permute.xlu0 %657
        %vm659 = vcmask 900096
        %v660 = vsel %vm659, %v652, %v654
        %v661 = vsel %vm659, %v654, %v656
        %v662 = vsel %vm659, %v656, %v658
        %v664 = vsel %vm165, %v644, 0
        %v666 = vsel %vm169, %v660, 0
        %v668 = vsel %vm169, %v661, 0
        %v670 = vsel %vm169, %v662, 0
        %672 = vmatprep.subr.mxu0 %v668
        %673 = vmatpush1.msra.mxu0 %v666
        %674 = vmatprep.subr.mxu0 0.0
        %675 = vmatpush1.msra.mxu0 0.0
        %676 = vmatprep.subr.mxu0 0.0
        %677 = vmatpush1.msra.mxu0 0.0
        %678 = vmatprep.subr.mxu0 0.0
        %679 = vmatpush1.msra.mxu0 0.0
        %680 = vmatprep.subr.mxu0 0.0
        %681 = vmatpush1.msra.mxu0 0.0
        %682 = vmatprep.subr.mxu0 0.0
        %683 = vmatpush1.msra.mxu0 0.0
        %684 = vmatprep.subr.mxu0 0.0
        %685 = vmatpush1.msra.mxu0 0.0
        %686 = vmatprep.subr.mxu0 0.0
        %687 = vmatpush1.msra.mxu0 0.0
        %688 = vmatprep.subr.mxu0 0.0
        %689 = vmatpush1.msra.mxu0 0.0
        %690 = vmatprep.subr.mxu0 0.0
        %691 = vmatpush1.msra.mxu0 0.0
        %692 = vmatprep.subr.mxu0 0.0
        %693 = vmatpush1.msra.mxu0 0.0
        %694 = vmatprep.subr.mxu0 0.0
        %695 = vmatpush1.msra.mxu0 0.0
        %696 = vmatprep.subr.mxu0 0.0
        %697 = vmatpush1.msra.mxu0 0.0
        %698 = vmatprep.subr.mxu0 0.0
        %699 = vmatpush1.msra.mxu0 0.0
        %700 = vmatprep.subr.mxu0 0.0
        %701 = vmatpush1.msra.mxu0 0.0
        %702 = vmatprep.subr.mxu0 0.0
        %703 = vmatpush1.msra.mxu0 0.0
        %704 = vmatprep.subr.mxu0 0.0
        %705 = vmatpush1.msra.mxu0 0.0
        %706 = vmatprep.subr.mxu0 0.0
        %707 = vmatpush1.msra.mxu0 0.0
        %708 = vmatprep.subr.mxu0 0.0
        %709 = vmatpush1.msra.mxu0 0.0
        %710 = vmatprep.subr.mxu0 0.0
        %711 = vmatpush1.msra.mxu0 0.0
        %712 = vmatprep.subr.mxu0 0.0
        %713 = vmatpush1.msra.mxu0 0.0
        %714 = vmatprep.subr.mxu0 0.0
        %715 = vmatpush1.msra.mxu0 0.0
        %716 = vmatprep.subr.mxu0 0.0
        %717 = vmatpush1.msra.mxu0 0.0
        %718 = vmatprep.subr.mxu0 0.0
        %719 = vmatpush1.msra.mxu0 0.0
        %720 = vmatprep.subr.mxu0 0.0
        %721 = vmatpush1.msra.mxu0 0.0
        %722 = vmatprep.subr.mxu0 0.0
        %723 = vmatpush1.msra.mxu0 0.0
        %724 = vmatprep.subr.mxu0 0.0
        %725 = vmatpush1.msra.mxu0 0.0
        %726 = vmatprep.subr.mxu0 0.0
        %727 = vmatpush1.msra.mxu0 0.0
        %728 = vmatprep.subr.mxu0 0.0
        %729 = vmatpush1.msra.mxu0 0.0
        %730 = vmatprep.subr.mxu0 0.0
        %731 = vmatpush1.msra.mxu0 0.0
        %732 = vmatprep.subr.mxu0 0.0
        %733 = vmatpush1.msra.mxu0 0.0
        %734 = vmatprep.subr.mxu0 0.0
        %735 = vmatpush1.msra.mxu0 0.0
        %736 = vmatprep.mubr.f32.mxu0 0.0
        %737 = vmatmul.mubr.f32.gmra.mrb[0].mxu0 %v664
        %v738 = vpop.f32.mrb[0].mxu0
        %v739 = vadd.f32 0.0, %v738
        %v740 = vpop.f32.mrb[0].mxu0
        %v741 = vadd.f32 0.0, %v740
        %742 = vdwg.mxu0
        %743 = vmatprep.subr.mxu0 0.0
        %744 = vmatpush1.msra.mxu0 %v670
        %745 = vmatprep.subr.mxu0 0.0
        %746 = vmatpush1.msra.mxu0 0.0
        %747 = vmatprep.subr.mxu0 0.0
        %748 = vmatpush1.msra.mxu0 0.0
        %749 = vmatprep.subr.mxu0 0.0
        %750 = vmatpush1.msra.mxu0 0.0
        %751 = vmatprep.subr.mxu0 0.0
        %752 = vmatpush1.msra.mxu0 0.0
        %753 = vmatprep.subr.mxu0 0.0
        %754 = vmatpush1.msra.mxu0 0.0
        %755 = vmatprep.subr.mxu0 0.0
        %756 = vmatpush1.msra.mxu0 0.0
        %757 = vmatprep.subr.mxu0 0.0
        %758 = vmatpush1.msra.mxu0 0.0
        %759 = vmatprep.subr.mxu0 0.0
        %760 = vmatpush1.msra.mxu0 0.0
        %761 = vmatprep.subr.mxu0 0.0
        %762 = vmatpush1.msra.mxu0 0.0
        %763 = vmatprep.subr.mxu0 0.0
        %764 = vmatpush1.msra.mxu0 0.0
        %765 = vmatprep.subr.mxu0 0.0
        %766 = vmatpush1.msra.mxu0 0.0
        %767 = vmatprep.subr.mxu0 0.0
        %768 = vmatpush1.msra.mxu0 0.0
        %769 = vmatprep.subr.mxu0 0.0
        %770 = vmatpush1.msra.mxu0 0.0
        %771 = vmatprep.subr.mxu0 0.0
        %772 = vmatpush1.msra.mxu0 0.0
        %773 = vmatprep.subr.mxu0 0.0
        %774 = vmatpush1.msra.mxu0 0.0
        %775 = vmatprep.subr.mxu0 0.0
        %776 = vmatpush1.msra.mxu0 0.0
        %777 = vmatprep.subr.mxu0 0.0
        %778 = vmatpush1.msra.mxu0 0.0
        %779 = vmatprep.subr.mxu0 0.0
        %780 = vmatpush1.msra.mxu0 0.0
        %781 = vmatprep.subr.mxu0 0.0
        %782 = vmatpush1.msra.mxu0 0.0
        %783 = vmatprep.subr.mxu0 0.0
        %784 = vmatpush1.msra.mxu0 0.0
        %785 = vmatprep.subr.mxu0 0.0
        %786 = vmatpush1.msra.mxu0 0.0
        %787 = vmatprep.subr.mxu0 0.0
        %788 = vmatpush1.msra.mxu0 0.0
        %789 = vmatprep.subr.mxu0 0.0
        %790 = vmatpush1.msra.mxu0 0.0
        %791 = vmatprep.subr.mxu0 0.0
        %792 = vmatpush1.msra.mxu0 0.0
        %793 = vmatprep.subr.mxu0 0.0
        %794 = vmatpush1.msra.mxu0 0.0
        %795 = vmatprep.subr.mxu0 0.0
        %796 = vmatpush1.msra.mxu0 0.0
        %797 = vmatprep.subr.mxu0 0.0
        %798 = vmatpush1.msra.mxu0 0.0
        %799 = vmatprep.subr.mxu0 0.0
        %800 = vmatpush1.msra.mxu0 0.0
        %801 = vmatprep.subr.mxu0 0.0
        %802 = vmatpush1.msra.mxu0 0.0
        %803 = vmatprep.subr.mxu0 0.0
        %804 = vmatpush1.msra.mxu0 0.0
        %805 = vmatprep.subr.mxu0 0.0
        %806 = vmatpush1.msra.mxu0 0.0
        %807 = vmatprep.mubr.f32.mxu0 0.0
        %808 = vmatmul.mubr.f32.gmra.mrb[0].mxu0 %v664
        %v809 = vpop.f32.mrb[0].mxu0
        %v810 = vadd.f32 0.0, %v809
        %v811 = vpop.f32.mrb[0].mxu0
        %812 = vdwg.mxu0
        %v813 = vadd.f32 %v640, %v739
        %v814 = vadd.f32 %v641, %v741
        %v815 = vadd.f32 %v642, %v810
        %s816 = scalar_lea.vmem %s1, 32
        %v817 = vld [vmem:[%s816] sm:$0xff]
        %v818 = vld [vmem:[%s141] sm:$0xff]
        %v819 = vld [vmem:[%s141 + $0x8] sm:$0xff]
        %v822 = vcombine.high %v818, %v818
        %v823 = vcombine.high %v819, %v819
        %824 = vrot.lane.b32.xlu0 %v818, 109
        %v825 = vpop.permute.xlu0 %824
        %826 = vrot.lane.b32.xlu0 %v822, 109
        %v827 = vpop.permute.xlu0 %826
        %828 = vrot.lane.b32.xlu0 %v819, 109
        %v829 = vpop.permute.xlu0 %828
        %830 = vrot.lane.b32.xlu0 %v823, 109
        %v831 = vpop.permute.xlu0 %830
        %vm832 = vcmask 891904
        %v833 = vsel %vm832, %v825, %v827
        %v834 = vsel %vm832, %v827, %v829
        %v835 = vsel %vm832, %v829, %v831
        %v837 = vsel %vm165, %v817, 0
        %v839 = vsel %vm169, %v833, 0
        %v841 = vsel %vm169, %v834, 0
        %v843 = vsel %vm169, %v835, 0
        %845 = vmatprep.subr.mxu0 %v841
        %846 = vmatpush1.msra.mxu0 %v839
        %847 = vmatprep.subr.mxu0 0.0
        %848 = vmatpush1.msra.mxu0 0.0
        %849 = vmatprep.subr.mxu0 0.0
        %850 = vmatpush1.msra.mxu0 0.0
        %851 = vmatprep.subr.mxu0 0.0
        %852 = vmatpush1.msra.mxu0 0.0
        %853 = vmatprep.subr.mxu0 0.0
        %854 = vmatpush1.msra.mxu0 0.0
        %855 = vmatprep.subr.mxu0 0.0
        %856 = vmatpush1.msra.mxu0 0.0
        %857 = vmatprep.subr.mxu0 0.0
        %858 = vmatpush1.msra.mxu0 0.0
        %859 = vmatprep.subr.mxu0 0.0
        %860 = vmatpush1.msra.mxu0 0.0
        %861 = vmatprep.subr.mxu0 0.0
        %862 = vmatpush1.msra.mxu0 0.0
        %863 = vmatprep.subr.mxu0 0.0
        %864 = vmatpush1.msra.mxu0 0.0
        %865 = vmatprep.subr.mxu0 0.0
        %866 = vmatpush1.msra.mxu0 0.0
        %867 = vmatprep.subr.mxu0 0.0
        %868 = vmatpush1.msra.mxu0 0.0
        %869 = vmatprep.subr.mxu0 0.0
        %870 = vmatpush1.msra.mxu0 0.0
        %871 = vmatprep.subr.mxu0 0.0
        %872 = vmatpush1.msra.mxu0 0.0
        %873 = vmatprep.subr.mxu0 0.0
        %874 = vmatpush1.msra.mxu0 0.0
        %875 = vmatprep.subr.mxu0 0.0
        %876 = vmatpush1.msra.mxu0 0.0
        %877 = vmatprep.subr.mxu0 0.0
        %878 = vmatpush1.msra.mxu0 0.0
        %879 = vmatprep.subr.mxu0 0.0
        %880 = vmatpush1.msra.mxu0 0.0
        %881 = vmatprep.subr.mxu0 0.0
        %882 = vmatpush1.msra.mxu0 0.0
        %883 = vmatprep.subr.mxu0 0.0
        %884 = vmatpush1.msra.mxu0 0.0
        %885 = vmatprep.subr.mxu0 0.0
        %886 = vmatpush1.msra.mxu0 0.0
        %887 = vmatprep.subr.mxu0 0.0
        %888 = vmatpush1.msra.mxu0 0.0
        %889 = vmatprep.subr.mxu0 0.0
        %890 = vmatpush1.msra.mxu0 0.0
        %891 = vmatprep.subr.mxu0 0.0
        %892 = vmatpush1.msra.mxu0 0.0
        %893 = vmatprep.subr.mxu0 0.0
        %894 = vmatpush1.msra.mxu0 0.0
        %895 = vmatprep.subr.mxu0 0.0
        %896 = vmatpush1.msra.mxu0 0.0
        %897 = vmatprep.subr.mxu0 0.0
        %898 = vmatpush1.msra.mxu0 0.0
        %899 = vmatprep.subr.mxu0 0.0
        %900 = vmatpush1.msra.mxu0 0.0
        %901 = vmatprep.subr.mxu0 0.0
        %902 = vmatpush1.msra.mxu0 0.0
        %903 = vmatprep.subr.mxu0 0.0
        %904 = vmatpush1.msra.mxu0 0.0
        %905 = vmatprep.subr.mxu0 0.0
        %906 = vmatpush1.msra.mxu0 0.0
        %907 = vmatprep.subr.mxu0 0.0
        %908 = vmatpush1.msra.mxu0 0.0
        %909 = vmatprep.mubr.f32.mxu0 0.0
        %910 = vmatmul.mubr.f32.gmra.mrb[0].mxu0 %v837
        %v911 = vpop.f32.mrb[0].mxu0
        %v912 = vadd.f32 0.0, %v911
        %v913 = vpop.f32.mrb[0].mxu0
        %v914 = vadd.f32 0.0, %v913
        %915 = vdwg.mxu0
        %916 = vmatprep.subr.mxu0 0.0
        %917 = vmatpush1.msra.mxu0 %v843
        %918 = vmatprep.subr.mxu0 0.0
        %919 = vmatpush1.msra.mxu0 0.0
        %920 = vmatprep.subr.mxu0 0.0
        %921 = vmatpush1.msra.mxu0 0.0
        %922 = vmatprep.subr.mxu0 0.0
        %923 = vmatpush1.msra.mxu0 0.0
        %924 = vmatprep.subr.mxu0 0.0
        %925 = vmatpush1.msra.mxu0 0.0
        %926 = vmatprep.subr.mxu0 0.0
        %927 = vmatpush1.msra.mxu0 0.0
        %928 = vmatprep.subr.mxu0 0.0
        %929 = vmatpush1.msra.mxu0 0.0
        %930 = vmatprep.subr.mxu0 0.0
        %931 = vmatpush1.msra.mxu0 0.0
        %932 = vmatprep.subr.mxu0 0.0
        %933 = vmatpush1.msra.mxu0 0.0
        %934 = vmatprep.subr.mxu0 0.0
        %935 = vmatpush1.msra.mxu0 0.0
        %936 = vmatprep.subr.mxu0 0.0
        %937 = vmatpush1.msra.mxu0 0.0
        %938 = vmatprep.subr.mxu0 0.0
        %939 = vmatpush1.msra.mxu0 0.0
        %940 = vmatprep.subr.mxu0 0.0
        %941 = vmatpush1.msra.mxu0 0.0
        %942 = vmatprep.subr.mxu0 0.0
        %943 = vmatpush1.msra.mxu0 0.0
        %944 = vmatprep.subr.mxu0 0.0
        %945 = vmatpush1.msra.mxu0 0.0
        %946 = vmatprep.subr.mxu0 0.0
        %947 = vmatpush1.msra.mxu0 0.0
        %948 = vmatprep.subr.mxu0 0.0
        %949 = vmatpush1.msra.mxu0 0.0
        %950 = vmatprep.subr.mxu0 0.0
        %951 = vmatpush1.msra.mxu0 0.0
        %952 = vmatprep.subr.mxu0 0.0
        %953 = vmatpush1.msra.mxu0 0.0
        %954 = vmatprep.subr.mxu0 0.0
        %955 = vmatpush1.msra.mxu0 0.0
        %956 = vmatprep.subr.mxu0 0.0
        %957 = vmatpush1.msra.mxu0 0.0
        %958 = vmatprep.subr.mxu0 0.0
        %959 = vmatpush1.msra.mxu0 0.0
        %960 = vmatprep.subr.mxu0 0.0
        %961 = vmatpush1.msra.mxu0 0.0
        %962 = vmatprep.subr.mxu0 0.0
        %963 = vmatpush1.msra.mxu0 0.0
        %964 = vmatprep.subr.mxu0 0.0
        %965 = vmatpush1.msra.mxu0 0.0
        %966 = vmatprep.subr.mxu0 0.0
        %967 = vmatpush1.msra.mxu0 0.0
        %968 = vmatprep.subr.mxu0 0.0
        %969 = vmatpush1.msra.mxu0 0.0
        %970 = vmatprep.subr.mxu0 0.0
        %971 = vmatpush1.msra.mxu0 0.0
        %972 = vmatprep.subr.mxu0 0.0
        %973 = vmatpush1.msra.mxu0 0.0
        %974 = vmatprep.subr.mxu0 0.0
        %975 = vmatpush1.msra.mxu0 0.0
        %976 = vmatprep.subr.mxu0 0.0
        %977 = vmatpush1.msra.mxu0 0.0
        %978 = vmatprep.subr.mxu0 0.0
        %979 = vmatpush1.msra.mxu0 0.0
        %980 = vmatprep.mubr.f32.mxu0 0.0
        %981 = vmatmul.mubr.f32.gmra.mrb[0].mxu0 %v837
        %v982 = vpop.f32.mrb[0].mxu0
        %v983 = vadd.f32 0.0, %v982
        %v984 = vpop.f32.mrb[0].mxu0
        %985 = vdwg.mxu0
        %v986 = vadd.f32 %v813, %v912
        %v987 = vadd.f32 %v814, %v914
        %v988 = vadd.f32 %v815, %v983
        %s989 = scalar_lea.vmem %s1, 40
        %v990 = vld [vmem:[%s989] sm:$0xff]
        %v991 = vld [vmem:[%s141] sm:$0xff]
        %v992 = vld [vmem:[%s141 + $0x8] sm:$0xff]
        %v995 = vcombine.high %v991, %v991
        %v996 = vcombine.high %v992, %v992
        %997 = vrot.lane.b32.xlu0 %v991, 108
        %v998 = vpop.permute.xlu0 %997
        %999 = vrot.lane.b32.xlu0 %v995, 108
        %v1000 = vpop.permute.xlu0 %999
        %1001 = vrot.lane.b32.xlu0 %v992, 108
        %v1002 = vpop.permute.xlu0 %1001
        %1003 = vrot.lane.b32.xlu0 %v996, 108
        %v1004 = vpop.permute.xlu0 %1003
        %vm1005 = vcmask 883712
        %v1006 = vsel %vm1005, %v998, %v1000
        %v1007 = vsel %vm1005, %v1000, %v1002
        %v1008 = vsel %vm1005, %v1002, %v1004
        %v1010 = vsel %vm165, %v990, 0
        %v1012 = vsel %vm169, %v1006, 0
        %v1014 = vsel %vm169, %v1007, 0
        %v1016 = vsel %vm169, %v1008, 0
        %1018 = vmatprep.subr.mxu0 %v1014
        %1019 = vmatpush1.msra.mxu0 %v1012
        %1020 = vmatprep.subr.mxu0 0.0
        %1021 = vmatpush1.msra.mxu0 0.0
        %1022 = vmatprep.subr.mxu0 0.0
        %1023 = vmatpush1.msra.mxu0 0.0
        %1024 = vmatprep.subr.mxu0 0.0
        %1025 = vmatpush1.msra.mxu0 0.0
        %1026 = vmatprep.subr.mxu0 0.0
        %1027 = vmatpush1.msra.mxu0 0.0
        %1028 = vmatprep.subr.mxu0 0.0
        %1029 = vmatpush1.msra.mxu0 0.0
        %1030 = vmatprep.subr.mxu0 0.0
        %1031 = vmatpush1.msra.mxu0 0.0
        %1032 = vmatprep.subr.mxu0 0.0
        %1033 = vmatpush1.msra.mxu0 0.0
        %1034 = vmatprep.subr.mxu0 0.0
        %1035 = vmatpush1.msra.mxu0 0.0
        %1036 = vmatprep.subr.mxu0 0.0
        %1037 = vmatpush1.msra.mxu0 0.0
        %1038 = vmatprep.subr.mxu0 0.0
        %1039 = vmatpush1.msra.mxu0 0.0
        %1040 = vmatprep.subr.mxu0 0.0
        %1041 = vmatpush1.msra.mxu0 0.0
        %1042 = vmatprep.subr.mxu0 0.0
        %1043 = vmatpush1.msra.mxu0 0.0
        %1044 = vmatprep.subr.mxu0 0.0
        %1045 = vmatpush1.msra.mxu0 0.0
        %1046 = vmatprep.subr.mxu0 0.0
        %1047 = vmatpush1.msra.mxu0 0.0
        %1048 = vmatprep.subr.mxu0 0.0
        %1049 = vmatpush1.msra.mxu0 0.0
        %1050 = vmatprep.subr.mxu0 0.0
        %1051 = vmatpush1.msra.mxu0 0.0
        %1052 = vmatprep.subr.mxu0 0.0
        %1053 = vmatpush1.msra.mxu0 0.0
        %1054 = vmatprep.subr.mxu0 0.0
        %1055 = vmatpush1.msra.mxu0 0.0
        %1056 = vmatprep.subr.mxu0 0.0
        %1057 = vmatpush1.msra.mxu0 0.0
        %1058 = vmatprep.subr.mxu0 0.0
        %1059 = vmatpush1.msra.mxu0 0.0
        %1060 = vmatprep.subr.mxu0 0.0
        %1061 = vmatpush1.msra.mxu0 0.0
        %1062 = vmatprep.subr.mxu0 0.0
        %1063 = vmatpush1.msra.mxu0 0.0
        %1064 = vmatprep.subr.mxu0 0.0
        %1065 = vmatpush1.msra.mxu0 0.0
        %1066 = vmatprep.subr.mxu0 0.0
        %1067 = vmatpush1.msra.mxu0 0.0
        %1068 = vmatprep.subr.mxu0 0.0
        %1069 = vmatpush1.msra.mxu0 0.0
        %1070 = vmatprep.subr.mxu0 0.0
        %1071 = vmatpush1.msra.mxu0 0.0
        %1072 = vmatprep.subr.mxu0 0.0
        %1073 = vmatpush1.msra.mxu0 0.0
        %1074 = vmatprep.subr.mxu0 0.0
        %1075 = vmatpush1.msra.mxu0 0.0
        %1076 = vmatprep.subr.mxu0 0.0
        %1077 = vmatpush1.msra.mxu0 0.0
        %1078 = vmatprep.subr.mxu0 0.0
        %1079 = vmatpush1.msra.mxu0 0.0
        %1080 = vmatprep.subr.mxu0 0.0
        %1081 = vmatpush1.msra.mxu0 0.0
        %1082 = vmatprep.mubr.f32.mxu0 0.0
        %1083 = vmatmul.mubr.f32.gmra.mrb[0].mxu0 %v1010
        %v1084 = vpop.f32.mrb[0].mxu0
        %v1085 = vadd.f32 0.0, %v1084
        %v1086 = vpop.f32.mrb[0].mxu0
        %v1087 = vadd.f32 0.0, %v1086
        %1088 = vdwg.mxu0
        %1089 = vmatprep.subr.mxu0 0.0
        %1090 = vmatpush1.msra.mxu0 %v1016
        %1091 = vmatprep.subr.mxu0 0.0
        %1092 = vmatpush1.msra.mxu0 0.0
        %1093 = vmatprep.subr.mxu0 0.0
        %1094 = vmatpush1.msra.mxu0 0.0
        %1095 = vmatprep.subr.mxu0 0.0
        %1096 = vmatpush1.msra.mxu0 0.0
        %1097 = vmatprep.subr.mxu0 0.0
        %1098 = vmatpush1.msra.mxu0 0.0
        %1099 = vmatprep.subr.mxu0 0.0
        %1100 = vmatpush1.msra.mxu0 0.0
        %1101 = vmatprep.subr.mxu0 0.0
        %1102 = vmatpush1.msra.mxu0 0.0
        %1103 = vmatprep.subr.mxu0 0.0
        %1104 = vmatpush1.msra.mxu0 0.0
        %1105 = vmatprep.subr.mxu0 0.0
        %1106 = vmatpush1.msra.mxu0 0.0
        %1107 = vmatprep.subr.mxu0 0.0
        %1108 = vmatpush1.msra.mxu0 0.0
        %1109 = vmatprep.subr.mxu0 0.0
        %1110 = vmatpush1.msra.mxu0 0.0
        %1111 = vmatprep.subr.mxu0 0.0
        %1112 = vmatpush1.msra.mxu0 0.0
        %1113 = vmatprep.subr.mxu0 0.0
        %1114 = vmatpush1.msra.mxu0 0.0
        %1115 = vmatprep.subr.mxu0 0.0
        %1116 = vmatpush1.msra.mxu0 0.0
        %1117 = vmatprep.subr.mxu0 0.0
        %1118 = vmatpush1.msra.mxu0 0.0
        %1119 = vmatprep.subr.mxu0 0.0
        %1120 = vmatpush1.msra.mxu0 0.0
        %1121 = vmatprep.subr.mxu0 0.0
        %1122 = vmatpush1.msra.mxu0 0.0
        %1123 = vmatprep.subr.mxu0 0.0
        %1124 = vmatpush1.msra.mxu0 0.0
        %1125 = vmatprep.subr.mxu0 0.0
        %1126 = vmatpush1.msra.mxu0 0.0
        %1127 = vmatprep.subr.mxu0 0.0
        %1128 = vmatpush1.msra.mxu0 0.0
        %1129 = vmatprep.subr.mxu0 0.0
        %1130 = vmatpush1.msra.mxu0 0.0
        %1131 = vmatprep.subr.mxu0 0.0
        %1132 = vmatpush1.msra.mxu0 0.0
        %1133 = vmatprep.subr.mxu0 0.0
        %1134 = vmatpush1.msra.mxu0 0.0
        %1135 = vmatprep.subr.mxu0 0.0
        %1136 = vmatpush1.msra.mxu0 0.0
        %1137 = vmatprep.subr.mxu0 0.0
        %1138 = vmatpush1.msra.mxu0 0.0
        %1139 = vmatprep.subr.mxu0 0.0
        %1140 = vmatpush1.msra.mxu0 0.0
        %1141 = vmatprep.subr.mxu0 0.0
        %1142 = vmatpush1.msra.mxu0 0.0
        %1143 = vmatprep.subr.mxu0 0.0
        %1144 = vmatpush1.msra.mxu0 0.0
        %1145 = vmatprep.subr.mxu0 0.0
        %1146 = vmatpush1.msra.mxu0 0.0
        %1147 = vmatprep.subr.mxu0 0.0
        %1148 = vmatpush1.msra.mxu0 0.0
        %1149 = vmatprep.subr.mxu0 0.0
        %1150 = vmatpush1.msra.mxu0 0.0
        %1151 = vmatprep.subr.mxu0 0.0
        %1152 = vmatpush1.msra.mxu0 0.0
        %1153 = vmatprep.mubr.f32.mxu0 0.0
        %1154 = vmatmul.mubr.f32.gmra.mrb[0].mxu0 %v1010
        %v1155 = vpop.f32.mrb[0].mxu0
        %v1156 = vadd.f32 0.0, %v1155
        %v1157 = vpop.f32.mrb[0].mxu0
        %1158 = vdwg.mxu0
        %v1159 = vadd.f32 %v986, %v1085
        %v1160 = vadd.f32 %v987, %v1087
        %v1161 = vadd.f32 %v988, %v1156
        %s1162 = scalar_lea.vmem %s1, 48
        %v1163 = vld [vmem:[%s1162] sm:$0xff]
        %v1164 = vld [vmem:[%s141] sm:$0xff]
        %v1165 = vld [vmem:[%s141 + $0x8] sm:$0xff]
        %v1168 = vcombine.high %v1164, %v1164
        %v1169 = vcombine.high %v1165, %v1165
        %1170 = vrot.lane.b32.xlu0 %v1164, 92
        %v1171 = vpop.permute.xlu0 %1170
        %1172 = vrot.lane.b32.xlu0 %v1168, 92
        %v1173 = vpop.permute.xlu0 %1172
        %1174 = vrot.lane.b32.xlu0 %v1165, 92
        %v1175 = vpop.permute.xlu0 %1174
        %1176 = vrot.lane.b32.xlu0 %v1169, 92
        %v1177 = vpop.permute.xlu0 %1176
        %vm1178 = vcmask 752640
        %v1179 = vsel %vm1178, %v1171, %v1173
        %v1180 = vsel %vm1178, %v1173, %v1175
        %v1181 = vsel %vm1178, %v1175, %v1177
        %v1183 = vsel %vm165, %v1163, 0
        %v1185 = vsel %vm169, %v1179, 0
        %v1187 = vsel %vm169, %v1180, 0
        %v1189 = vsel %vm169, %v1181, 0
        %1191 = vmatprep.subr.mxu0 %v1187
        %1192 = vmatpush1.msra.mxu0 %v1185
        %1193 = vmatprep.subr.mxu0 0.0
        %1194 = vmatpush1.msra.mxu0 0.0
        %1195 = vmatprep.subr.mxu0 0.0
        %1196 = vmatpush1.msra.mxu0 0.0
        %1197 = vmatprep.subr.mxu0 0.0
        %1198 = vmatpush1.msra.mxu0 0.0
        %1199 = vmatprep.subr.mxu0 0.0
        %1200 = vmatpush1.msra.mxu0 0.0
        %1201 = vmatprep.subr.mxu0 0.0
        %1202 = vmatpush1.msra.mxu0 0.0
        %1203 = vmatprep.subr.mxu0 0.0
        %1204 = vmatpush1.msra.mxu0 0.0
        %1205 = vmatprep.subr.mxu0 0.0
        %1206 = vmatpush1.msra.mxu0 0.0
        %1207 = vmatprep.subr.mxu0 0.0
        %1208 = vmatpush1.msra.mxu0 0.0
        %1209 = vmatprep.subr.mxu0 0.0
        %1210 = vmatpush1.msra.mxu0 0.0
        %1211 = vmatprep.subr.mxu0 0.0
        %1212 = vmatpush1.msra.mxu0 0.0
        %1213 = vmatprep.subr.mxu0 0.0
        %1214 = vmatpush1.msra.mxu0 0.0
        %1215 = vmatprep.subr.mxu0 0.0
        %1216 = vmatpush1.msra.mxu0 0.0
        %1217 = vmatprep.subr.mxu0 0.0
        %1218 = vmatpush1.msra.mxu0 0.0
        %1219 = vmatprep.subr.mxu0 0.0
        %1220 = vmatpush1.msra.mxu0 0.0
        %1221 = vmatprep.subr.mxu0 0.0
        %1222 = vmatpush1.msra.mxu0 0.0
        %1223 = vmatprep.subr.mxu0 0.0
        %1224 = vmatpush1.msra.mxu0 0.0
        %1225 = vmatprep.subr.mxu0 0.0
        %1226 = vmatpush1.msra.mxu0 0.0
        %1227 = vmatprep.subr.mxu0 0.0
        %1228 = vmatpush1.msra.mxu0 0.0
        %1229 = vmatprep.subr.mxu0 0.0
        %1230 = vmatpush1.msra.mxu0 0.0
        %1231 = vmatprep.subr.mxu0 0.0
        %1232 = vmatpush1.msra.mxu0 0.0
        %1233 = vmatprep.subr.mxu0 0.0
        %1234 = vmatpush1.msra.mxu0 0.0
        %1235 = vmatprep.subr.mxu0 0.0
        %1236 = vmatpush1.msra.mxu0 0.0
        %1237 = vmatprep.subr.mxu0 0.0
        %1238 = vmatpush1.msra.mxu0 0.0
        %1239 = vmatprep.subr.mxu0 0.0
        %1240 = vmatpush1.msra.mxu0 0.0
        %1241 = vmatprep.subr.mxu0 0.0
        %1242 = vmatpush1.msra.mxu0 0.0
        %1243 = vmatprep.subr.mxu0 0.0
        %1244 = vmatpush1.msra.mxu0 0.0
        %1245 = vmatprep.subr.mxu0 0.0
        %1246 = vmatpush1.msra.mxu0 0.0
        %1247 = vmatprep.subr.mxu0 0.0
        %1248 = vmatpush1.msra.mxu0 0.0
        %1249 = vmatprep.subr.mxu0 0.0
        %1250 = vmatpush1.msra.mxu0 0.0
        %1251 = vmatprep.subr.mxu0 0.0
        %1252 = vmatpush1.msra.mxu0 0.0
        %1253 = vmatprep.subr.mxu0 0.0
        %1254 = vmatpush1.msra.mxu0 0.0
        %1255 = vmatprep.mubr.f32.mxu0 0.0
        %1256 = vmatmul.mubr.f32.gmra.mrb[0].mxu0 %v1183
        %v1257 = vpop.f32.mrb[0].mxu0
        %v1258 = vadd.f32 0.0, %v1257
        %v1259 = vpop.f32.mrb[0].mxu0
        %v1260 = vadd.f32 0.0, %v1259
        %1261 = vdwg.mxu0
        %1262 = vmatprep.subr.mxu0 0.0
        %1263 = vmatpush1.msra.mxu0 %v1189
        %1264 = vmatprep.subr.mxu0 0.0
        %1265 = vmatpush1.msra.mxu0 0.0
        %1266 = vmatprep.subr.mxu0 0.0
        %1267 = vmatpush1.msra.mxu0 0.0
        %1268 = vmatprep.subr.mxu0 0.0
        %1269 = vmatpush1.msra.mxu0 0.0
        %1270 = vmatprep.subr.mxu0 0.0
        %1271 = vmatpush1.msra.mxu0 0.0
        %1272 = vmatprep.subr.mxu0 0.0
        %1273 = vmatpush1.msra.mxu0 0.0
        %1274 = vmatprep.subr.mxu0 0.0
        %1275 = vmatpush1.msra.mxu0 0.0
        %1276 = vmatprep.subr.mxu0 0.0
        %1277 = vmatpush1.msra.mxu0 0.0
        %1278 = vmatprep.subr.mxu0 0.0
        %1279 = vmatpush1.msra.mxu0 0.0
        %1280 = vmatprep.subr.mxu0 0.0
        %1281 = vmatpush1.msra.mxu0 0.0
        %1282 = vmatprep.subr.mxu0 0.0
        %1283 = vmatpush1.msra.mxu0 0.0
        %1284 = vmatprep.subr.mxu0 0.0
        %1285 = vmatpush1.msra.mxu0 0.0
        %1286 = vmatprep.subr.mxu0 0.0
        %1287 = vmatpush1.msra.mxu0 0.0
        %1288 = vmatprep.subr.mxu0 0.0
        %1289 = vmatpush1.msra.mxu0 0.0
        %1290 = vmatprep.subr.mxu0 0.0
        %1291 = vmatpush1.msra.mxu0 0.0
        %1292 = vmatprep.subr.mxu0 0.0
        %1293 = vmatpush1.msra.mxu0 0.0
        %1294 = vmatprep.subr.mxu0 0.0
        %1295 = vmatpush1.msra.mxu0 0.0
        %1296 = vmatprep.subr.mxu0 0.0
        %1297 = vmatpush1.msra.mxu0 0.0
        %1298 = vmatprep.subr.mxu0 0.0
        %1299 = vmatpush1.msra.mxu0 0.0
        %1300 = vmatprep.subr.mxu0 0.0
        %1301 = vmatpush1.msra.mxu0 0.0
        %1302 = vmatprep.subr.mxu0 0.0
        %1303 = vmatpush1.msra.mxu0 0.0
        %1304 = vmatprep.subr.mxu0 0.0
        %1305 = vmatpush1.msra.mxu0 0.0
        %1306 = vmatprep.subr.mxu0 0.0
        %1307 = vmatpush1.msra.mxu0 0.0
        %1308 = vmatprep.subr.mxu0 0.0
        %1309 = vmatpush1.msra.mxu0 0.0
        %1310 = vmatprep.subr.mxu0 0.0
        %1311 = vmatpush1.msra.mxu0 0.0
        %1312 = vmatprep.subr.mxu0 0.0
        %1313 = vmatpush1.msra.mxu0 0.0
        %1314 = vmatprep.subr.mxu0 0.0
        %1315 = vmatpush1.msra.mxu0 0.0
        %1316 = vmatprep.subr.mxu0 0.0
        %1317 = vmatpush1.msra.mxu0 0.0
        %1318 = vmatprep.subr.mxu0 0.0
        %1319 = vmatpush1.msra.mxu0 0.0
        %1320 = vmatprep.subr.mxu0 0.0
        %1321 = vmatpush1.msra.mxu0 0.0
        %1322 = vmatprep.subr.mxu0 0.0
        %1323 = vmatpush1.msra.mxu0 0.0
        %1324 = vmatprep.subr.mxu0 0.0
        %1325 = vmatpush1.msra.mxu0 0.0
        %1326 = vmatprep.mubr.f32.mxu0 0.0
        %1327 = vmatmul.mubr.f32.gmra.mrb[0].mxu0 %v1183
        %v1328 = vpop.f32.mrb[0].mxu0
        %v1329 = vadd.f32 0.0, %v1328
        %v1330 = vpop.f32.mrb[0].mxu0
        %1331 = vdwg.mxu0
        %v1332 = vadd.f32 %v1159, %v1258
        %v1333 = vadd.f32 %v1160, %v1260
        %v1334 = vadd.f32 %v1161, %v1329
        %s1335 = scalar_lea.vmem %s1, 56
        %v1336 = vld [vmem:[%s1335] sm:$0xff]
        %v1337 = vld [vmem:[%s141] sm:$0xff]
        %v1338 = vld [vmem:[%s141 + $0x8] sm:$0xff]
        %v1341 = vcombine.high %v1337, %v1337
        %v1342 = vcombine.high %v1338, %v1338
        %1343 = vrot.lane.b32.xlu0 %v1337, 91
        %v1344 = vpop.permute.xlu0 %1343
        %1345 = vrot.lane.b32.xlu0 %v1341, 91
        %v1346 = vpop.permute.xlu0 %1345
        %1347 = vrot.lane.b32.xlu0 %v1338, 91
        %v1348 = vpop.permute.xlu0 %1347
        %1349 = vrot.lane.b32.xlu0 %v1342, 91
        %v1350 = vpop.permute.xlu0 %1349
        %vm1351 = vcmask 744448
        %v1352 = vsel %vm1351, %v1344, %v1346
        %v1353 = vsel %vm1351, %v1346, %v1348
        %v1354 = vsel %vm1351, %v1348, %v1350
        %v1356 = vsel %vm165, %v1336, 0
        %v1358 = vsel %vm169, %v1352, 0
        %v1360 = vsel %vm169, %v1353, 0
        %v1362 = vsel %vm169, %v1354, 0
        %1364 = vmatprep.subr.mxu0 %v1360
        %1365 = vmatpush1.msra.mxu0 %v1358
        %1366 = vmatprep.subr.mxu0 0.0
        %1367 = vmatpush1.msra.mxu0 0.0
        %1368 = vmatprep.subr.mxu0 0.0
        %1369 = vmatpush1.msra.mxu0 0.0
        %1370 = vmatprep.subr.mxu0 0.0
        %1371 = vmatpush1.msra.mxu0 0.0
        %1372 = vmatprep.subr.mxu0 0.0
        %1373 = vmatpush1.msra.mxu0 0.0
        %1374 = vmatprep.subr.mxu0 0.0
        %1375 = vmatpush1.msra.mxu0 0.0
        %1376 = vmatprep.subr.mxu0 0.0
        %1377 = vmatpush1.msra.mxu0 0.0
        %1378 = vmatprep.subr.mxu0 0.0
        %1379 = vmatpush1.msra.mxu0 0.0
        %1380 = vmatprep.subr.mxu0 0.0
        %1381 = vmatpush1.msra.mxu0 0.0
        %1382 = vmatprep.subr.mxu0 0.0
        %1383 = vmatpush1.msra.mxu0 0.0
        %1384 = vmatprep.subr.mxu0 0.0
        %1385 = vmatpush1.msra.mxu0 0.0
        %1386 = vmatprep.subr.mxu0 0.0
        %1387 = vmatpush1.msra.mxu0 0.0
        %1388 = vmatprep.subr.mxu0 0.0
        %1389 = vmatpush1.msra.mxu0 0.0
        %1390 = vmatprep.subr.mxu0 0.0
        %1391 = vmatpush1.msra.mxu0 0.0
        %1392 = vmatprep.subr.mxu0 0.0
        %1393 = vmatpush1.msra.mxu0 0.0
        %1394 = vmatprep.subr.mxu0 0.0
        %1395 = vmatpush1.msra.mxu0 0.0
        %1396 = vmatprep.subr.mxu0 0.0
        %1397 = vmatpush1.msra.mxu0 0.0
        %1398 = vmatprep.subr.mxu0 0.0
        %1399 = vmatpush1.msra.mxu0 0.0
        %1400 = vmatprep.subr.mxu0 0.0
        %1401 = vmatpush1.msra.mxu0 0.0
        %1402 = vmatprep.subr.mxu0 0.0
        %1403 = vmatpush1.msra.mxu0 0.0
        %1404 = vmatprep.subr.mxu0 0.0
        %1405 = vmatpush1.msra.mxu0 0.0
        %1406 = vmatprep.subr.mxu0 0.0
        %1407 = vmatpush1.msra.mxu0 0.0
        %1408 = vmatprep.subr.mxu0 0.0
        %1409 = vmatpush1.msra.mxu0 0.0
        %1410 = vmatprep.subr.mxu0 0.0
        %1411 = vmatpush1.msra.mxu0 0.0
        %1412 = vmatprep.subr.mxu0 0.0
        %1413 = vmatpush1.msra.mxu0 0.0
        %1414 = vmatprep.subr.mxu0 0.0
        %1415 = vmatpush1.msra.mxu0 0.0
        %1416 = vmatprep.subr.mxu0 0.0
        %1417 = vmatpush1.msra.mxu0 0.0
        %1418 = vmatprep.subr.mxu0 0.0
        %1419 = vmatpush1.msra.mxu0 0.0
        %1420 = vmatprep.subr.mxu0 0.0
        %1421 = vmatpush1.msra.mxu0 0.0
        %1422 = vmatprep.subr.mxu0 0.0
        %1423 = vmatpush1.msra.mxu0 0.0
        %1424 = vmatprep.subr.mxu0 0.0
        %1425 = vmatpush1.msra.mxu0 0.0
        %1426 = vmatprep.subr.mxu0 0.0
        %1427 = vmatpush1.msra.mxu0 0.0
        %1428 = vmatprep.mubr.f32.mxu0 0.0
        %1429 = vmatmul.mubr.f32.gmra.mrb[0].mxu0 %v1356
        %v1430 = vpop.f32.mrb[0].mxu0
        %v1431 = vadd.f32 0.0, %v1430
        %v1432 = vpop.f32.mrb[0].mxu0
        %v1433 = vadd.f32 0.0, %v1432
        %1434 = vdwg.mxu0
        %1435 = vmatprep.subr.mxu0 0.0
        %1436 = vmatpush1.msra.mxu0 %v1362
        %1437 = vmatprep.subr.mxu0 0.0
        %1438 = vmatpush1.msra.mxu0 0.0
        %1439 = vmatprep.subr.mxu0 0.0
        %1440 = vmatpush1.msra.mxu0 0.0
        %1441 = vmatprep.subr.mxu0 0.0
        %1442 = vmatpush1.msra.mxu0 0.0
        %1443 = vmatprep.subr.mxu0 0.0
        %1444 = vmatpush1.msra.mxu0 0.0
        %1445 = vmatprep.subr.mxu0 0.0
        %1446 = vmatpush1.msra.mxu0 0.0
        %1447 = vmatprep.subr.mxu0 0.0
        %1448 = vmatpush1.msra.mxu0 0.0
        %1449 = vmatprep.subr.mxu0 0.0
        %1450 = vmatpush1.msra.mxu0 0.0
        %1451 = vmatprep.subr.mxu0 0.0
        %1452 = vmatpush1.msra.mxu0 0.0
        %1453 = vmatprep.subr.mxu0 0.0
        %1454 = vmatpush1.msra.mxu0 0.0
        %1455 = vmatprep.subr.mxu0 0.0
        %1456 = vmatpush1.msra.mxu0 0.0
        %1457 = vmatprep.subr.mxu0 0.0
        %1458 = vmatpush1.msra.mxu0 0.0
        %1459 = vmatprep.subr.mxu0 0.0
        %1460 = vmatpush1.msra.mxu0 0.0
        %1461 = vmatprep.subr.mxu0 0.0
        %1462 = vmatpush1.msra.mxu0 0.0
        %1463 = vmatprep.subr.mxu0 0.0
        %1464 = vmatpush1.msra.mxu0 0.0
        %1465 = vmatprep.subr.mxu0 0.0
        %1466 = vmatpush1.msra.mxu0 0.0
        %1467 = vmatprep.subr.mxu0 0.0
        %1468 = vmatpush1.msra.mxu0 0.0
        %1469 = vmatprep.subr.mxu0 0.0
        %1470 = vmatpush1.msra.mxu0 0.0
        %1471 = vmatprep.subr.mxu0 0.0
        %1472 = vmatpush1.msra.mxu0 0.0
        %1473 = vmatprep.subr.mxu0 0.0
        %1474 = vmatpush1.msra.mxu0 0.0
        %1475 = vmatprep.subr.mxu0 0.0
        %1476 = vmatpush1.msra.mxu0 0.0
        %1477 = vmatprep.subr.mxu0 0.0
        %1478 = vmatpush1.msra.mxu0 0.0
        %1479 = vmatprep.subr.mxu0 0.0
        %1480 = vmatpush1.msra.mxu0 0.0
        %1481 = vmatprep.subr.mxu0 0.0
        %1482 = vmatpush1.msra.mxu0 0.0
        %1483 = vmatprep.subr.mxu0 0.0
        %1484 = vmatpush1.msra.mxu0 0.0
        %1485 = vmatprep.subr.mxu0 0.0
        %1486 = vmatpush1.msra.mxu0 0.0
        %1487 = vmatprep.subr.mxu0 0.0
        %1488 = vmatpush1.msra.mxu0 0.0
        %1489 = vmatprep.subr.mxu0 0.0
        %1490 = vmatpush1.msra.mxu0 0.0
        %1491 = vmatprep.subr.mxu0 0.0
        %1492 = vmatpush1.msra.mxu0 0.0
        %1493 = vmatprep.subr.mxu0 0.0
        %1494 = vmatpush1.msra.mxu0 0.0
        %1495 = vmatprep.subr.mxu0 0.0
        %1496 = vmatpush1.msra.mxu0 0.0
        %1497 = vmatprep.subr.mxu0 0.0
        %1498 = vmatpush1.msra.mxu0 0.0
        %1499 = vmatprep.mubr.f32.mxu0 0.0
        %1500 = vmatmul.mubr.f32.gmra.mrb[0].mxu0 %v1356
        %v1501 = vpop.f32.mrb[0].mxu0
        %v1502 = vadd.f32 0.0, %v1501
        %v1503 = vpop.f32.mrb[0].mxu0
        %1504 = vdwg.mxu0
        %v1505 = vadd.f32 %v1332, %v1431
        %v1506 = vadd.f32 %v1333, %v1433
        %v1507 = vadd.f32 %v1334, %v1502
        %s1508 = scalar_lea.vmem %s1, 64
        %v1509 = vld [vmem:[%s1508] sm:$0xff]
        %v1510 = vld [vmem:[%s141] sm:$0xff]
        %v1511 = vld [vmem:[%s141 + $0x8] sm:$0xff]
        %v1514 = vcombine.high %v1510, %v1510
        %v1515 = vcombine.high %v1511, %v1511
        %1516 = vrot.lane.b32.xlu0 %v1510, 90
        %v1517 = vpop.permute.xlu0 %1516
        %1518 = vrot.lane.b32.xlu0 %v1514, 90
        %v1519 = vpop.permute.xlu0 %1518
        %1520 = vrot.lane.b32.xlu0 %v1511, 90
        %v1521 = vpop.permute.xlu0 %1520
        %1522 = vrot.lane.b32.xlu0 %v1515, 90
        %v1523 = vpop.permute.xlu0 %1522
        %vm1524 = vcmask 736256
        %v1525 = vsel %vm1524, %v1517, %v1519
        %v1526 = vsel %vm1524, %v1519, %v1521
        %v1527 = vsel %vm1524, %v1521, %v1523
        %v1529 = vsel %vm165, %v1509, 0
        %v1531 = vsel %vm169, %v1525, 0
        %v1533 = vsel %vm169, %v1526, 0
        %v1535 = vsel %vm169, %v1527, 0
        %1537 = vmatprep.subr.mxu0 %v1533
        %1538 = vmatpush1.msra.mxu0 %v1531
        %1539 = vmatprep.subr.mxu0 0.0
        %1540 = vmatpush1.msra.mxu0 0.0
        %1541 = vmatprep.subr.mxu0 0.0
        %1542 = vmatpush1.msra.mxu0 0.0
        %1543 = vmatprep.subr.mxu0 0.0
        %1544 = vmatpush1.msra.mxu0 0.0
        %1545 = vmatprep.subr.mxu0 0.0
        %1546 = vmatpush1.msra.mxu0 0.0
        %1547 = vmatprep.subr.mxu0 0.0
        %1548 = vmatpush1.msra.mxu0 0.0
        %1549 = vmatprep.subr.mxu0 0.0
        %1550 = vmatpush1.msra.mxu0 0.0
        %1551 = vmatprep.subr.mxu0 0.0
        %1552 = vmatpush1.msra.mxu0 0.0
        %1553 = vmatprep.subr.mxu0 0.0
        %1554 = vmatpush1.msra.mxu0 0.0
        %1555 = vmatprep.subr.mxu0 0.0
        %1556 = vmatpush1.msra.mxu0 0.0
        %1557 = vmatprep.subr.mxu0 0.0
        %1558 = vmatpush1.msra.mxu0 0.0
        %1559 = vmatprep.subr.mxu0 0.0
        %1560 = vmatpush1.msra.mxu0 0.0
        %1561 = vmatprep.subr.mxu0 0.0
        %1562 = vmatpush1.msra.mxu0 0.0
        %1563 = vmatprep.subr.mxu0 0.0
        %1564 = vmatpush1.msra.mxu0 0.0
        %1565 = vmatprep.subr.mxu0 0.0
        %1566 = vmatpush1.msra.mxu0 0.0
        %1567 = vmatprep.subr.mxu0 0.0
        %1568 = vmatpush1.msra.mxu0 0.0
        %1569 = vmatprep.subr.mxu0 0.0
        %1570 = vmatpush1.msra.mxu0 0.0
        %1571 = vmatprep.subr.mxu0 0.0
        %1572 = vmatpush1.msra.mxu0 0.0
        %1573 = vmatprep.subr.mxu0 0.0
        %1574 = vmatpush1.msra.mxu0 0.0
        %1575 = vmatprep.subr.mxu0 0.0
        %1576 = vmatpush1.msra.mxu0 0.0
        %1577 = vmatprep.subr.mxu0 0.0
        %1578 = vmatpush1.msra.mxu0 0.0
        %1579 = vmatprep.subr.mxu0 0.0
        %1580 = vmatpush1.msra.mxu0 0.0
        %1581 = vmatprep.subr.mxu0 0.0
        %1582 = vmatpush1.msra.mxu0 0.0
        %1583 = vmatprep.subr.mxu0 0.0
        %1584 = vmatpush1.msra.mxu0 0.0
        %1585 = vmatprep.subr.mxu0 0.0
        %1586 = vmatpush1.msra.mxu0 0.0
        %1587 = vmatprep.subr.mxu0 0.0
        %1588 = vmatpush1.msra.mxu0 0.0
        %1589 = vmatprep.subr.mxu0 0.0
        %1590 = vmatpush1.msra.mxu0 0.0
        %1591 = vmatprep.subr.mxu0 0.0
        %1592 = vmatpush1.msra.mxu0 0.0
        %1593 = vmatprep.subr.mxu0 0.0
        %1594 = vmatpush1.msra.mxu0 0.0
        %1595 = vmatprep.subr.mxu0 0.0
        %1596 = vmatpush1.msra.mxu0 0.0
        %1597 = vmatprep.subr.mxu0 0.0
        %1598 = vmatpush1.msra.mxu0 0.0
        %1599 = vmatprep.subr.mxu0 0.0
        %1600 = vmatpush1.msra.mxu0 0.0
        %1601 = vmatprep.mubr.f32.mxu0 0.0
        %1602 = vmatmul.mubr.f32.gmra.mrb[0].mxu0 %v1529
        %v1603 = vpop.f32.mrb[0].mxu0
        %v1604 = vadd.f32 0.0, %v1603
        %v1605 = vpop.f32.mrb[0].mxu0
        %v1606 = vadd.f32 0.0, %v1605
        %1607 = vdwg.mxu0
        %1608 = vmatprep.subr.mxu0 0.0
        %1609 = vmatpush1.msra.mxu0 %v1535
        %1610 = vmatprep.subr.mxu0 0.0
        %1611 = vmatpush1.msra.mxu0 0.0
        %1612 = vmatprep.subr.mxu0 0.0
        %1613 = vmatpush1.msra.mxu0 0.0
        %1614 = vmatprep.subr.mxu0 0.0
        %1615 = vmatpush1.msra.mxu0 0.0
        %1616 = vmatprep.subr.mxu0 0.0
        %1617 = vmatpush1.msra.mxu0 0.0
        %1618 = vmatprep.subr.mxu0 0.0
        %1619 = vmatpush1.msra.mxu0 0.0
        %1620 = vmatprep.subr.mxu0 0.0
        %1621 = vmatpush1.msra.mxu0 0.0
        %1622 = vmatprep.subr.mxu0 0.0
        %1623 = vmatpush1.msra.mxu0 0.0
        %1624 = vmatprep.subr.mxu0 0.0
        %1625 = vmatpush1.msra.mxu0 0.0
        %1626 = vmatprep.subr.mxu0 0.0
        %1627 = vmatpush1.msra.mxu0 0.0
        %1628 = vmatprep.subr.mxu0 0.0
        %1629 = vmatpush1.msra.mxu0 0.0
        %1630 = vmatprep.subr.mxu0 0.0
        %1631 = vmatpush1.msra.mxu0 0.0
        %1632 = vmatprep.subr.mxu0 0.0
        %1633 = vmatpush1.msra.mxu0 0.0
        %1634 = vmatprep.subr.mxu0 0.0
        %1635 = vmatpush1.msra.mxu0 0.0
        %1636 = vmatprep.subr.mxu0 0.0
        %1637 = vmatpush1.msra.mxu0 0.0
        %1638 = vmatprep.subr.mxu0 0.0
        %1639 = vmatpush1.msra.mxu0 0.0
        %1640 = vmatprep.subr.mxu0 0.0
        %1641 = vmatpush1.msra.mxu0 0.0
        %1642 = vmatprep.subr.mxu0 0.0
        %1643 = vmatpush1.msra.mxu0 0.0
        %1644 = vmatprep.subr.mxu0 0.0
        %1645 = vmatpush1.msra.mxu0 0.0
        %1646 = vmatprep.subr.mxu0 0.0
        %1647 = vmatpush1.msra.mxu0 0.0
        %1648 = vmatprep.subr.mxu0 0.0
        %1649 = vmatpush1.msra.mxu0 0.0
        %1650 = vmatprep.subr.mxu0 0.0
        %1651 = vmatpush1.msra.mxu0 0.0
        %1652 = vmatprep.subr.mxu0 0.0
        %1653 = vmatpush1.msra.mxu0 0.0
        %1654 = vmatprep.subr.mxu0 0.0
        %1655 = vmatpush1.msra.mxu0 0.0
        %1656 = vmatprep.subr.mxu0 0.0
        %1657 = vmatpush1.msra.mxu0 0.0
        %1658 = vmatprep.subr.mxu0 0.0
        %1659 = vmatpush1.msra.mxu0 0.0
        %1660 = vmatprep.subr.mxu0 0.0
        %1661 = vmatpush1.msra.mxu0 0.0
        %1662 = vmatprep.subr.mxu0 0.0
        %1663 = vmatpush1.msra.mxu0 0.0
        %1664 = vmatprep.subr.mxu0 0.0
        %1665 = vmatpush1.msra.mxu0 0.0
        %1666 = vmatprep.subr.mxu0 0.0
        %1667 = vmatpush1.msra.mxu0 0.0
        %1668 = vmatprep.subr.mxu0 0.0
        %1669 = vmatpush1.msra.mxu0 0.0
        %1670 = vmatprep.subr.mxu0 0.0
        %1671 = vmatpush1.msra.mxu0 0.0
        %1672 = vmatprep.mubr.f32.mxu0 0.0
        %1673 = vmatmul.mubr.f32.gmra.mrb[0].mxu0 %v1529
        %v1674 = vpop.f32.mrb[0].mxu0
        %v1675 = vadd.f32 0.0, %v1674
        %v1676 = vpop.f32.mrb[0].mxu0
        %1677 = vdwg.mxu0
        %v1678 = vadd.f32 %v1505, %v1604
        %v1679 = vadd.f32 %v1506, %v1606
        %v1680 = vadd.f32 %v1507, %v1675
        %1681 = vst [vmem:[%s136] sm:$0xff] %v1678
        %1682 = vst [vmem:[%s136 + $0x8] sm:$0xff] %v1679
        %1683 = vst [vmem:[%s136 + $0x10] sm:$0xff] %v1680
        %s1684 = sand.u32 %s71, 1
        %s1685 = scalar_lea.sflag [#allocation3], %s1684
        %s1686 = sand.u32 %s71, 1
        %s1687 = smul.addr %s1686, 24
        %s1688 = scalar_lea.vmem [#allocation2], %s1687
        // Predicated region
        $region29: #{tpu_custom_call.1} parent=27 // pred_check
          %p1689 = pneg %p81
        $region30: #{tpu_custom_call.1} parent=27 // pred_check_branch
          %1691 = sbr.rel (%p1689) target = $region32
        $region31: #{tpu_custom_call.1} parent=27 // pred_region
          %s1693 = ssub.s32 384, 384
          %1694 = vsyncadd %s1685, %s1693
          %s1695 = smul.addr %s16, 3
          %s1696 = smul.addr %s1695, 128
          %s1697 = scalar_lea.hbm %s2, %s1696
          %s1699 = sshll.u32 %s1688, 4
          %s1700 = int_to_ptr.vmem [resolvable:$true] %s1699
          %1702 = dma.vmem_to_hbm [thread:$0]  %s1700, 384, %s1697, %s1685
        $region32: #{tpu_custom_call.1} parent=27 // pred_fallthru
          _
      $region28: #{tpu_custom_call.1} parent=5 // pred_fallthru
        _
      %p1703 = scmp.le.s32.totalorder 2, %s11
      // Predicated region
      $region33: #{tpu_custom_call.1} parent=5 // pred_check
        %p1704 = pneg %p1703
      $region34: #{tpu_custom_call.1} parent=5 // pred_check_branch
        %1706 = sbr.rel (%p1704) target = $region36
      $region35: #{tpu_custom_call.1} parent=5 // pred_region
        %s1707 = ssub.s32 %s11, 2
        // Predicated region
        $region37: #{tpu_custom_call.1} parent=35 // pred_check
          %p1708 = pneg %p87
        $region38: #{tpu_custom_call.1} parent=35 // pred_check_branch
          %1710 = sbr.rel (%p1708) target = $region40
        $region39: #{tpu_custom_call.1} parent=35 // pred_region
          %s1711 = sand.u32 %s72, 1
          %s1712 = scalar_lea.sflag [#allocation3], %s1711
          %s1713 = sand.u32 %s72, 1
          %s1714 = smul.addr %s1713, 24
          %s1715 = scalar_lea.vmem [#allocation2], %s1714
          %1716 = dma.done %s1712, 384
        $region40: #{tpu_custom_call.1} parent=35 // pred_fallthru
          _
      $region36: #{tpu_custom_call.1} parent=5 // pred_fallthru
        _
    $region6: #{tpu_custom_call.1} parent=1 // loop_footer
      %s15 = sadd.s32 1, %s11
    $region7: #{tpu_custom_call.1} parent=1 // loop_footer_branch
      %10 = sbr.rel target = $region3
    $region8: #{tpu_custom_call.1} parent=1 // loop_exit
      _
    %1717 = vsyncpa [#allocation3], 1
    %s1718 = scalar_lea.sflag [#allocation3], 1
    %1719 = vsyncpa %s1718, 1

</llo_original>
